<compile_context>
chip_gen: v7x
topology: tpu7x:2x2x1
jax: 0.10.0
libtpu: 0.0.40
codegen_flags: <defaults>
</compile_context>

<pallas_src>
import functools
import math

import jax
import jax.numpy as jnp
from jax.experimental import pallas as pl
from jax.experimental.pallas import tpu as pltpu


# TODO(synk): build_grid() lives outside the module in the original repo; this
# follows the uORF/uOCF convention: pixel-centred (x, y) coords in [-1, 1].
def build_grid(h, w, dtype=jnp.float32):
    xs = jnp.linspace(-1.0 + 1.0 / w, 1.0 - 1.0 / w, w, dtype=dtype)
    ys = jnp.linspace(-1.0 + 1.0 / h, 1.0 - 1.0 / h, h, dtype=dtype)
    yy, xx = jnp.meshgrid(ys, xs, indexing="ij")
    return jnp.stack([xx, yy], axis=-1)  # (h, w, 2)


# ----------------------------------------------------------------------------
# Fused kernel: one grid step == (one image, one spatial tile).
# ----------------------------------------------------------------------------
def _encoder_pos_kernel(x_ref, bge_ref, ps_ref, wkv_ref, wm_ref, bm_ref, *o_refs):
    # x_ref:   (1, T, D)   image features (compute dtype, e.g. bf16)
    # bge_ref: (T, D)      base grid embedding  grid4 @ Wg^T + bg       (f32)
    # ps_ref:  (1, N, D)   per-slot shift        pos4 @ Wg^T            (f32)
    # wkv_ref: (D, 2D)     fused [Wk^T | Wv^T]                          (compute dtype)
    # wm_ref:  (D, S)      LN-gamma-folded MLP weight                   (compute dtype)
    # bm_ref:  (1, S)      beta @ Wm^T + bias                           (f32)
    # o_refs:  slab (1, N, T, 2S)   or   planes ((1, N, T, S), (1, N, T, S))
    t_hw = x_ref.shape[1]
    dim = bge_ref.shape[-1]
    n_slots = ps_ref.shape[1]

    # Fused D -> 2D projection: one full-width MXU matmul, f32 accumulation.
    kv = jnp.dot(x_ref[0], wkv_ref[...], preferred_element_type=jnp.float32)  # (T, 2D)
    bge = bge_ref[...]                                                        # (T, D)

    # Row-stack [k ; v] and mean-centre ONCE per tile (not per slot): the slot
    # dependence of the grid embedding is a constant (1, D) row, so
    #   LN(kvge - row) == normalize((kvge - mean(kvge)) - (row - mean(row))).
    kvge = jnp.concatenate([kv[:, :dim] + bge, kv[:, dim:] + bge], axis=0)    # (2T, D)
    kvge_cen = kvge - jnp.mean(kvge, axis=-1, keepdims=True)

    ps = ps_ref[0]              # (N, D) f32
    wm = wm_ref[...]            # (D, S)
    bm = bm_ref[...]            # (1, S) f32

    # TODO(synk): switch to lax.fori_loop over slots if n_slots grows past ~8
    # (a static unroll keeps n copies of the (2T, D)/(2T, S) temps live).
    for j in range(n_slots):
        row = ps[j:j + 1, :]                                    # (1, D)
        row_cen = row - jnp.mean(row, axis=-1, keepdims=True)   # (1, D)
        cen = kvge_cen - row_cen                                 # (2T, D)
        var = jnp.mean(cen * cen, axis=-1, keepdims=True)        # f32 LN stats
        hn = (cen * jax.lax.rsqrt(var + 1e-5)).astype(wm.dtype)
        out = jnp.dot(hn, wm, preferred_element_type=jnp.float32) + bm   # (2T, S)

        if len(o_refs) == 1:
            # slot_dim < 128: lane-dense [k | v] slab (width 2S) per slot.
            o_ref = o_refs[0]
            o_ref[0, j] = jnp.concatenate(
                [out[:t_hw], out[t_hw:]], axis=-1).astype(o_ref.dtype)
        else:
            # slot_dim % 128 == 0: direct lane-dense stores, no lane concat.
            ok_ref, ov_ref = o_refs
            ok_ref[0, j] = out[:t_hw].astype(ok_ref.dtype)
            ov_ref[0, j] = out[t_hw:].astype(ov_ref.dtype)


# ----------------------------------------------------------------------------
# Spatial-tile / VMEM-limit selection
# ----------------------------------------------------------------------------
def _pick_hw_tile(hw, n, dim, slot_dim, out_bytes, cmp_bytes, budget=24 << 20):
    def est(t):
        ins = (t * dim * cmp_bytes            # x tile
               + t * dim * 4                  # base grid embed
               + n * dim * 4                  # pos shift
               + dim * 2 * dim * cmp_bytes    # Wkv
               + dim * slot_dim * cmp_bytes   # Wm
               + slot_dim * 4)                # bias
        outs = n * t * 2 * slot_dim * out_bytes
        temps = 4 * (2 * t * dim * 4) + 2 * (2 * t * slot_dim * 4)
        return 2 * (ins + outs) + temps       # double-buffered I/O + live temps

    cands = [t for t in (2048, 1024, 512, 256, 128, 64, 32, 16, 8)
             if t <= hw and hw % t == 0] or [hw]
    tile = cands[-1]
    for t in cands:
        if est(t) <= budget:
            tile = t
            break
    # Safe on all generations (v7x has 64 MiB physical VMEM per TC).
    vmem_limit = int(min(max(2 * est(tile), 32 << 20), 48 << 20))
    return tile, vmem_limit


# ----------------------------------------------------------------------------
# Wrapper (shared by forward / forward_bg)
# ----------------------------------------------------------------------------
def _encoder_pos_embedding(params, x, h, w, position_latent, background,
                           compute_dtype=jnp.bfloat16):
    b, hw, dim = x.shape
    assert hw == h * w, (hw, h, w)

    f32 = jnp.float32
    grid2 = build_grid(h, w, f32).reshape(hw, 2)
    grid4 = jnp.concatenate([grid2, -grid2], axis=-1)              # (HW, 4)

    if position_latent is None:
        position_latent = jnp.zeros((b, 1, 2), f32)
    n = position_latent.shape[1]
    # cat([rel, -rel]) == cat([grid, -grid]) - cat([pos, -pos]).
    pos4 = jnp.concatenate([position_latent, -position_latent], axis=-1).astype(f32)

    if background:
        wk, wv = params["w_k_bg"], params["w_v_bg"]
        gamma, beta = params["ln_bg_g"], params["ln_bg_b"]
        wm, bm = params["mlp_bg_w"], params["mlp_bg_b"]
    else:
        wk, wv = params["w_k_fg"], params["w_v_fg"]
        gamma, beta = params["ln_fg_g"], params["ln_fg_b"]
        wm, bm = params["mlp_fg_w"], params["mlp_fg_b"]
    slot_dim = wm.shape[0]

    # Slot-invariant grid embedding (tiny K=4 matmul) + per-slot (1, D) shifts.
    wg_t = params["grid_w"].astype(f32).T                          # (4, D)
    base_ge = grid4 @ wg_t + params["grid_b"].astype(f32)          # (HW, D)
    pos_shift = pos4 @ wg_t                                        # (b, n, D)

    # Fused [Wk^T | Wv^T] RHS; LN gamma folded into Wm^T, beta into the bias.
    wkv = jnp.concatenate([wk.T, wv.T], axis=1).astype(compute_dtype)   # (D, 2D)
    wm_t = gamma.astype(f32)[:, None] * wm.astype(f32).T                # (D, S)
    bm_eff = beta.astype(f32) @ wm.astype(f32).T + bm.astype(f32)       # (S,)

    out_dtype = x.dtype
    split_planes = (slot_dim % 128 == 0)
    t_hw, vmem_limit = _pick_hw_tile(
        hw, n, dim, slot_dim,
        jnp.dtype(out_dtype).itemsize, jnp.dtype(compute_dtype).itemsize)

    if split_planes:
        out_shape = (jax.ShapeDtypeStruct((b, n, hw, slot_dim), out_dtype),
                     jax.ShapeDtypeStruct((b, n, hw, slot_dim), out_dtype))
        out_specs = (pl.BlockSpec((1, n, t_hw, slot_dim), lambda i, t: (i, 0, t, 0)),
                     pl.BlockSpec((1, n, t_hw, slot_dim), lambda i, t: (i, 0, t, 0)))
    else:
        out_shape = jax.ShapeDtypeStruct((b, n, hw, 2 * slot_dim), out_dtype)
        out_specs = pl.BlockSpec((1, n, t_hw, 2 * slot_dim), lambda i, t: (i, 0, t, 0))

    outs = pl.pallas_call(
        _encoder_pos_kernel,
        out_shape=out_shape,
        grid=(b, hw // t_hw),
        in_specs=[
            pl.BlockSpec((1, t_hw, dim), lambda i, t: (i, t, 0)),   # x
            pl.BlockSpec((t_hw, dim), lambda i, t: (t, 0)),         # base grid embed
            pl.BlockSpec((1, n, dim), lambda i, t: (i, 0, 0)),      # pos shift
            pl.BlockSpec((dim, 2 * dim), lambda i, t: (0, 0)),      # [Wk^T | Wv^T]
            pl.BlockSpec((dim, slot_dim), lambda i, t: (0, 0)),     # gamma-folded Wm^T
            pl.BlockSpec((1, slot_dim), lambda i, t: (0, 0)),       # folded bias
        ],
        out_specs=out_specs,
        compiler_params=pltpu.CompilerParams(
            dimension_semantics=("parallel", "parallel"),
            vmem_limit_bytes=vmem_limit),
    )(
        x.astype(compute_dtype),
        base_ge,
        pos_shift,
        wkv,
        wm_t.astype(compute_dtype),
        bm_eff.reshape(1, slot_dim),
    )

    if split_planes:
        return outs                                           # (k, v)
    return outs[..., :slot_dim], outs[..., slot_dim:]         # k, v


def encoder_pos_embedding_forward(params, x, h, w, position_latent=None,
                                  compute_dtype=jnp.bfloat16):
    return _encoder_pos_embedding(params, x, h, w, position_latent,
                                  background=False, compute_dtype=compute_dtype)


def encoder_pos_embedding_forward_bg(params, x, h, w, compute_dtype=jnp.bfloat16):
    return _encoder_pos_embedding(params, x, h, w, None,
                                  background=True, compute_dtype=compute_dtype)


# ----------------------------------------------------------------------------
# Deterministic PyTorch-like parameter init
# ----------------------------------------------------------------------------
def init_params(key, dim, slot_dim):
    ks = jax.random.split(key, 14)

    def _lin(k, fan_in, shape):
        bound = 1.0 / math.sqrt(fan_in)
        return jax.random.uniform(k, shape, jnp.float32, -bound, bound)

    return {
        "grid_w": _lin(ks[0], 4, (dim, 4)),
        "grid_b": _lin(ks[1], 4, (dim,)),
        "w_k_fg": _lin(ks[2], dim, (dim, dim)),
        "w_v_fg": _lin(ks[3], dim, (dim, dim)),
        "w_k_bg": _lin(ks[4], dim, (dim, dim)),
        "w_v_bg": _lin(ks[5], dim, (dim, dim)),
        # Non-trivial LN affine params exercise the gamma/beta -> Wm/bias fold.
        "ln_fg_g": 1.0 + 0.1 * jax.random.normal(ks[6], (dim,), jnp.float32),
        "ln_fg_b": 0.1 * jax.random.normal(ks[7], (dim,), jnp.float32),
        "ln_bg_g": 1.0 + 0.1 * jax.random.normal(ks[8], (dim,), jnp.float32),
        "ln_bg_b": 0.1 * jax.random.normal(ks[9], (dim,), jnp.float32),
        "mlp_fg_w": _lin(ks[10], dim, (slot_dim, dim)),
        "mlp_fg_b": _lin(ks[11], dim, (slot_dim,)),
        "mlp_bg_w": _lin(ks[12], dim, (slot_dim, dim)),
        "mlp_bg_b": _lin(ks[13], dim, (slot_dim,)),
    }


# ----------------------------------------------------------------------------
# Pure-JAX reference (mirrors the PyTorch forward)
# ----------------------------------------------------------------------------
def _reference(params, x, h, w, position_latent, background):
    hp = jax.lax.Precision.HIGHEST
    mm = functools.partial(jnp.matmul, precision=hp)
    b = x.shape[0]
    grid = build_grid(h, w, jnp.float32)                   # (h, w, 2)
    if position_latent is None:
        rel = jnp.broadcast_to(grid[None, None], (b, 1, h, w, 2))
    else:
        rel = grid[None, None] - position_latent[:, :, None, None, :]
    n = rel.shape[1]
    rel = jnp.concatenate([rel, -rel], axis=-1).reshape(b, n, h * w, 4)
    ge = mm(rel, params["grid_w"].T) + params["grid_b"]
    if background:
        kb = mm(x, params["w_k_bg"].T)
        vb = mm(x, params["w_v_bg"].T)
        g, bln, wm, bm = (params["ln_bg_g"], params["ln_bg_b"],
                          params["mlp_bg_w"], params["mlp_bg_b"])
    else:
        kb = mm(x, params["w_k_fg"].T)
        vb = mm(x, params["w_v_fg"].T)
        g, bln, wm, bm = (params["ln_fg_g"], params["ln_fg_b"],
                          params["mlp_fg_w"], params["mlp_fg_b"])

    def mlp(t):
        mu = t.mean(-1, keepdims=True)
        var = ((t - mu) ** 2).mean(-1, keepdims=True)
        tn = (t - mu) / jnp.sqrt(var + 1e-5) * g + bln
        return mm(tn, wm.T) + bm

    return mlp(kb[:, None] + ge), mlp(vb[:, None] + ge)


if __name__ == "__main__":
    key = jax.random.PRNGKey(0)
    kp, kx, kpos = jax.random.split(key, 3)

    b, h, w = 2, 8, 8
    n_slots = 3
    dim = 64

    x = jax.random.normal(kx, (b, h * w, dim), jnp.float32)
    pos = jax.random.uniform(kpos, (b, n_slots, 2), jnp.float32, -1.0, 1.0)

    fwd = jax.jit(encoder_pos_embedding_forward,
                  static_argnames=("h", "w", "compute_dtype"))
    fwd_bg = jax.jit(encoder_pos_embedding_forward_bg,
                     static_argnames=("h", "w", "compute_dtype"))

    # slot_dim=64 -> lane-dense [k|v] slab path; slot_dim=128 -> direct planes.
    for slot_dim in (64, 128):
        params = init_params(kp, dim, slot_dim)
        k_ref, v_ref = _reference(params, x, h, w, pos, background=False)
        kb_ref, vb_ref = _reference(params, x, h, w, None, background=True)

        for cdt, tol in ((jnp.float32, 2e-2), (jnp.bfloat16, 1e-1)):
            k, v = fwd(params, x, h=h, w=w, position_latent=pos, compute_dtype=cdt)
            kb, vb = fwd_bg(params, x, h=h, w=w, compute_dtype=cdt)
            jax.block_until_ready((k, v, kb, vb))

            assert k.shape == (b, n_slots, h * w, slot_dim), k.shape
            assert v.shape == (b, n_slots, h * w, slot_dim), v.shape
            assert kb.shape == (b, 1, h * w, slot_dim), kb.shape
            assert vb.shape == (b, 1, h * w, slot_dim), vb.shape

            for got, ref in ((k, k_ref), (v, v_ref), (kb, kb_ref), (vb, vb_ref)):
                got32 = got.astype(jnp.float32)
                err = float(jnp.max(jnp.abs(got32 - ref)))
                assert jnp.allclose(got32, ref, atol=tol, rtol=tol), (slot_dim, cdt, err)

    print("KERNEL_OK")
</pallas_src>

<mosaic_0001>
module attributes {stable_mosaic.version = 11 : i64} {
  func.func @_encoder_pos_kernel(%arg0: i32, %arg1: i32, %arg2: memref<1x64x64xf32, #tpu.memory_space<vmem>>, %arg3: memref<64x64xf32, #tpu.memory_space<vmem>>, %arg4: memref<1x3x64xf32, #tpu.memory_space<vmem>>, %arg5: memref<64x128xf32, #tpu.memory_space<vmem>>, %arg6: memref<64x64xf32, #tpu.memory_space<vmem>>, %arg7: memref<1x64xf32, #tpu.memory_space<vmem>>, %arg8: memref<1x3x64x128xf32, #tpu.memory_space<vmem>>) attributes {dimension_semantics = [#tpu.dimension_semantics<parallel>, #tpu.dimension_semantics<parallel>], iteration_bounds = array<i64: 2, 1>, scalar_prefetch = 0 : i64, scratch_operands = 0 : i64, tpu.core_type = #tpu.core_type<tc>, window_params = [{transform_indices = @transform_0, window_bounds = array<i64: 1, 64, 64>}, {transform_indices = @transform_1, window_bounds = array<i64: 64, 64>}, {transform_indices = @transform_2, window_bounds = array<i64: 1, 3, 64>}, {pipeline_mode = #tpu.pipeline_mode<synchronous>, transform_indices = @transform_3, window_bounds = array<i64: 64, 128>}, {pipeline_mode = #tpu.pipeline_mode<synchronous>, transform_indices = @transform_4, window_bounds = array<i64: 64, 64>}, {pipeline_mode = #tpu.pipeline_mode<synchronous>, transform_indices = @transform_5, window_bounds = array<i64: 1, 64>}, {transform_indices = @transform_6, window_bounds = array<i64: 1, 3, 64, 128>}]} {
    %c0 = arith.constant 0 : index
    %c0_0 = arith.constant 0 : index
    %c0_1 = arith.constant 0 : index
    %0 = vector.load %arg2[%c0, %c0_0, %c0_1] : memref<1x64x64xf32, #tpu.memory_space<vmem>>, vector<1x64x64xf32>
    %1 = vector.shape_cast %0 : vector<1x64x64xf32> to vector<64x64xf32>
    %c0_2 = arith.constant 0 : index
    %c0_3 = arith.constant 0 : index
    %2 = vector.load %arg5[%c0_2, %c0_3] : memref<64x128xf32, #tpu.memory_space<vmem>>, vector<64x128xf32>
    %cst = arith.constant dense<0.000000e+00> : vector<64x128xf32>
    %3 = tpu.matmul %1, %2, %cst {dimension_numbers = #tpu.dot_dimension_numbers<[1], [0], [0], [1], [0, 0, 1, 1], [], []>} : vector<64x64xf32>, vector<64x128xf32>, vector<64x128xf32> -> vector<64x128xf32>
    %c0_4 = arith.constant 0 : index
    %c0_5 = arith.constant 0 : index
    %4 = vector.load %arg3[%c0_4, %c0_5] : memref<64x64xf32, #tpu.memory_space<vmem>>, vector<64x64xf32>
    %5 = vector.extract_strided_slice %3 {offsets = [0, 0], sizes = [64, 64], strides = [1, 1]} : vector<64x128xf32> to vector<64x64xf32>
    %6 = arith.addf %5, %4 : vector<64x64xf32>
    %7 = vector.extract_strided_slice %3 {offsets = [0, 64], sizes = [64, 64], strides = [1, 1]} : vector<64x128xf32> to vector<64x64xf32>
    %8 = arith.addf %7, %4 : vector<64x64xf32>
    %9 = tpu.concatenate %6, %8 in 0 : vector<64x64xf32>, vector<64x64xf32> -> vector<128x64xf32>
    %cst_6 = arith.constant dense<0.000000e+00> : vector<128xf32>
    %10 = vector.multi_reduction <add>, %9, %cst_6 [1] : vector<128x64xf32> to vector<128xf32>
    %11 = vector.shape_cast %10 : vector<128xf32> to vector<128x1xf32>
    %cst_7 = arith.constant 6.400000e+01 : f32
    %12 = vector.broadcast %cst_7 : f32 to vector<128x1xf32>
    %13 = arith.divf %11, %12 : vector<128x1xf32>
    %14 = vector.broadcast %13 : vector<128x1xf32> to vector<128x64xf32>
    %15 = arith.subf %9, %14 : vector<128x64xf32>
    %c0_8 = arith.constant 0 : index
    %c0_9 = arith.constant 0 : index
    %c0_10 = arith.constant 0 : index
    %16 = vector.load %arg4[%c0_8, %c0_9, %c0_10] : memref<1x3x64xf32, #tpu.memory_space<vmem>>, vector<1x3x64xf32>
    %17 = vector.shape_cast %16 : vector<1x3x64xf32> to vector<3x64xf32>
    %c0_11 = arith.constant 0 : index
    %c0_12 = arith.constant 0 : index
    %18 = vector.load %arg6[%c0_11, %c0_12] : memref<64x64xf32, #tpu.memory_space<vmem>>, vector<64x64xf32>
    %c0_13 = arith.constant 0 : index
    %c0_14 = arith.constant 0 : index
    %19 = vector.load %arg7[%c0_13, %c0_14] : memref<1x64xf32, #tpu.memory_space<vmem>>, vector<1x64xf32>
    %20 = vector.extract_strided_slice %17 {offsets = [0, 0], sizes = [1, 64], strides = [1, 1]} : vector<3x64xf32> to vector<1x64xf32>
    %cst_15 = arith.constant dense<0.000000e+00> : vector<1xf32>
    %21 = vector.multi_reduction <add>, %20, %cst_15 [1] : vector<1x64xf32> to vector<1xf32>
    %22 = vector.shape_cast %21 : vector<1xf32> to vector<1x1xf32>
    %cst_16 = arith.constant 6.400000e+01 : f32
    %23 = vector.broadcast %cst_16 : f32 to vector<1x1xf32>
    %24 = arith.divf %22, %23 : vector<1x1xf32>
    %25 = vector.broadcast %24 : vector<1x1xf32> to vector<1x64xf32>
    %26 = arith.subf %20, %25 : vector<1x64xf32>
    %27 = vector.broadcast %26 : vector<1x64xf32> to vector<128x64xf32>
    %28 = arith.subf %15, %27 : vector<128x64xf32>
    %29 = arith.mulf %28, %28 : vector<128x64xf32>
    %cst_17 = arith.constant dense<0.000000e+00> : vector<128xf32>
    %30 = vector.multi_reduction <add>, %29, %cst_17 [1] : vector<128x64xf32> to vector<128xf32>
    %31 = vector.shape_cast %30 : vector<128xf32> to vector<128x1xf32>
    %cst_18 = arith.constant 6.400000e+01 : f32
    %32 = vector.broadcast %cst_18 : f32 to vector<128x1xf32>
    %33 = arith.divf %31, %32 : vector<128x1xf32>
    %cst_19 = arith.constant 9.99999974E-6 : f32
    %34 = vector.broadcast %cst_19 : f32 to vector<128x1xf32>
    %35 = arith.addf %33, %34 : vector<128x1xf32>
    %36 = math.rsqrt %35 : vector<128x1xf32>
    %37 = vector.broadcast %36 : vector<128x1xf32> to vector<128x64xf32>
    %38 = arith.mulf %28, %37 : vector<128x64xf32>
    %cst_20 = arith.constant dense<0.000000e+00> : vector<128x64xf32>
    %39 = tpu.matmul %38, %18, %cst_20 {dimension_numbers = #tpu.dot_dimension_numbers<[1], [0], [0], [1], [0, 0, 1, 1], [], []>} : vector<128x64xf32>, vector<64x64xf32>, vector<128x64xf32> -> vector<128x64xf32>
    %40 = vector.broadcast %19 : vector<1x64xf32> to vector<128x64xf32>
    %41 = arith.addf %39, %40 : vector<128x64xf32>
    %42 = vector.extract_strided_slice %41 {offsets = [0, 0], sizes = [64, 64], strides = [1, 1]} : vector<128x64xf32> to vector<64x64xf32>
    %43 = vector.extract_strided_slice %41 {offsets = [64, 0], sizes = [64, 64], strides = [1, 1]} : vector<128x64xf32> to vector<64x64xf32>
    %44 = tpu.concatenate %42, %43 in 1 : vector<64x64xf32>, vector<64x64xf32> -> vector<64x128xf32>
    %c0_21 = arith.constant 0 : index
    %c0_22 = arith.constant 0 : index
    %c0_23 = arith.constant 0 : index
    %c0_24 = arith.constant 0 : index
    %45 = vector.load %arg8[%c0_21, %c0_22, %c0_23, %c0_24] : memref<1x3x64x128xf32, #tpu.memory_space<vmem>>, vector<1x1x64x128xf32>
    %46 = vector.shape_cast %45 : vector<1x1x64x128xf32> to vector<64x128xf32>
    %47 = vector.shape_cast %44 : vector<64x128xf32> to vector<1x1x64x128xf32>
    tpu.vector_store %arg8[%c0_21, %c0_22, %c0_23, %c0_24], %47 {strides = array<i32>} : memref<1x3x64x128xf32, #tpu.memory_space<vmem>>, vector<1x1x64x128xf32>,
    %48 = vector.extract_strided_slice %17 {offsets = [1, 0], sizes = [1, 64], strides = [1, 1]} : vector<3x64xf32> to vector<1x64xf32>
    %cst_25 = arith.constant dense<0.000000e+00> : vector<1xf32>
    %49 = vector.multi_reduction <add>, %48, %cst_25 [1] : vector<1x64xf32> to vector<1xf32>
    %50 = vector.shape_cast %49 : vector<1xf32> to vector<1x1xf32>
    %cst_26 = arith.constant 6.400000e+01 : f32
    %51 = vector.broadcast %cst_26 : f32 to vector<1x1xf32>
    %52 = arith.divf %50, %51 : vector<1x1xf32>
    %53 = vector.broadcast %52 : vector<1x1xf32> to vector<1x64xf32>
    %54 = arith.subf %48, %53 : vector<1x64xf32>
    %55 = vector.broadcast %54 : vector<1x64xf32> to vector<128x64xf32>
    %56 = arith.subf %15, %55 : vector<128x64xf32>
    %57 = arith.mulf %56, %56 : vector<128x64xf32>
    %cst_27 = arith.constant dense<0.000000e+00> : vector<128xf32>
    %58 = vector.multi_reduction <add>, %57, %cst_27 [1] : vector<128x64xf32> to vector<128xf32>
    %59 = vector.shape_cast %58 : vector<128xf32> to vector<128x1xf32>
    %cst_28 = arith.constant 6.400000e+01 : f32
    %60 = vector.broadcast %cst_28 : f32 to vector<128x1xf32>
    %61 = arith.divf %59, %60 : vector<128x1xf32>
    %cst_29 = arith.constant 9.99999974E-6 : f32
    %62 = vector.broadcast %cst_29 : f32 to vector<128x1xf32>
    %63 = arith.addf %61, %62 : vector<128x1xf32>
    %64 = math.rsqrt %63 : vector<128x1xf32>
    %65 = vector.broadcast %64 : vector<128x1xf32> to vector<128x64xf32>
    %66 = arith.mulf %56, %65 : vector<128x64xf32>
    %cst_30 = arith.constant dense<0.000000e+00> : vector<128x64xf32>
    %67 = tpu.matmul %66, %18, %cst_30 {dimension_numbers = #tpu.dot_dimension_numbers<[1], [0], [0], [1], [0, 0, 1, 1], [], []>} : vector<128x64xf32>, vector<64x64xf32>, vector<128x64xf32> -> vector<128x64xf32>
    %68 = vector.broadcast %19 : vector<1x64xf32> to vector<128x64xf32>
    %69 = arith.addf %67, %68 : vector<128x64xf32>
    %70 = vector.extract_strided_slice %69 {offsets = [0, 0], sizes = [64, 64], strides = [1, 1]} : vector<128x64xf32> to vector<64x64xf32>
    %71 = vector.extract_strided_slice %69 {offsets = [64, 0], sizes = [64, 64], strides = [1, 1]} : vector<128x64xf32> to vector<64x64xf32>
    %72 = tpu.concatenate %70, %71 in 1 : vector<64x64xf32>, vector<64x64xf32> -> vector<64x128xf32>
    %c0_31 = arith.constant 0 : index
    %c1 = arith.constant 1 : index
    %c0_32 = arith.constant 0 : index
    %c0_33 = arith.constant 0 : index
    %73 = vector.load %arg8[%c0_31, %c1, %c0_32, %c0_33] : memref<1x3x64x128xf32, #tpu.memory_space<vmem>>, vector<1x1x64x128xf32>
    %74 = vector.shape_cast %73 : vector<1x1x64x128xf32> to vector<64x128xf32>
    %75 = vector.shape_cast %72 : vector<64x128xf32> to vector<1x1x64x128xf32>
    tpu.vector_store %arg8[%c0_31, %c1, %c0_32, %c0_33], %75 {strides = array<i32>} : memref<1x3x64x128xf32, #tpu.memory_space<vmem>>, vector<1x1x64x128xf32>,
    %76 = vector.extract_strided_slice %17 {offsets = [2, 0], sizes = [1, 64], strides = [1, 1]} : vector<3x64xf32> to vector<1x64xf32>
    %cst_34 = arith.constant dense<0.000000e+00> : vector<1xf32>
    %77 = vector.multi_reduction <add>, %76, %cst_34 [1] : vector<1x64xf32> to vector<1xf32>
    %78 = vector.shape_cast %77 : vector<1xf32> to vector<1x1xf32>
    %cst_35 = arith.constant 6.400000e+01 : f32
    %79 = vector.broadcast %cst_35 : f32 to vector<1x1xf32>
    %80 = arith.divf %78, %79 : vector<1x1xf32>
    %81 = vector.broadcast %80 : vector<1x1xf32> to vector<1x64xf32>
    %82 = arith.subf %76, %81 : vector<1x64xf32>
    %83 = vector.broadcast %82 : vector<1x64xf32> to vector<128x64xf32>
    %84 = arith.subf %15, %83 : vector<128x64xf32>
    %85 = arith.mulf %84, %84 : vector<128x64xf32>
    %cst_36 = arith.constant dense<0.000000e+00> : vector<128xf32>
    %86 = vector.multi_reduction <add>, %85, %cst_36 [1] : vector<128x64xf32> to vector<128xf32>
    %87 = vector.shape_cast %86 : vector<128xf32> to vector<128x1xf32>
    %cst_37 = arith.constant 6.400000e+01 : f32
    %88 = vector.broadcast %cst_37 : f32 to vector<128x1xf32>
    %89 = arith.divf %87, %88 : vector<128x1xf32>
    %cst_38 = arith.constant 9.99999974E-6 : f32
    %90 = vector.broadcast %cst_38 : f32 to vector<128x1xf32>
    %91 = arith.addf %89, %90 : vector<128x1xf32>
    %92 = math.rsqrt %91 : vector<128x1xf32>
    %93 = vector.broadcast %92 : vector<128x1xf32> to vector<128x64xf32>
    %94 = arith.mulf %84, %93 : vector<128x64xf32>
    %cst_39 = arith.constant dense<0.000000e+00> : vector<128x64xf32>
    %95 = tpu.matmul %94, %18, %cst_39 {dimension_numbers = #tpu.dot_dimension_numbers<[1], [0], [0], [1], [0, 0, 1, 1], [], []>} : vector<128x64xf32>, vector<64x64xf32>, vector<128x64xf32> -> vector<128x64xf32>
    %96 = vector.broadcast %19 : vector<1x64xf32> to vector<128x64xf32>
    %97 = arith.addf %95, %96 : vector<128x64xf32>
    %98 = vector.extract_strided_slice %97 {offsets = [0, 0], sizes = [64, 64], strides = [1, 1]} : vector<128x64xf32> to vector<64x64xf32>
    %99 = vector.extract_strided_slice %97 {offsets = [64, 0], sizes = [64, 64], strides = [1, 1]} : vector<128x64xf32> to vector<64x64xf32>
    %100 = tpu.concatenate %98, %99 in 1 : vector<64x64xf32>, vector<64x64xf32> -> vector<64x128xf32>
    %c0_40 = arith.constant 0 : index
    %c2 = arith.constant 2 : index
    %c0_41 = arith.constant 0 : index
    %c0_42 = arith.constant 0 : index
    %101 = vector.load %arg8[%c0_40, %c2, %c0_41, %c0_42] : memref<1x3x64x128xf32, #tpu.memory_space<vmem>>, vector<1x1x64x128xf32>
    %102 = vector.shape_cast %101 : vector<1x1x64x128xf32> to vector<64x128xf32>
    %103 = vector.shape_cast %100 : vector<64x128xf32> to vector<1x1x64x128xf32>
    tpu.vector_store %arg8[%c0_40, %c2, %c0_41, %c0_42], %103 {strides = array<i32>} : memref<1x3x64x128xf32, #tpu.memory_space<vmem>>, vector<1x1x64x128xf32>,
    return
  }
  func.func @transform_0(%arg0: i32, %arg1: i32) -> (i32, i32, i32) {
    %c0_i32 = arith.constant 0 : i32
    %c0_i32_0 = arith.constant 0 : i32
    return %arg0, %arg1, %c0_i32 : i32, i32, i32
  }
  func.func @transform_1(%arg0: i32, %arg1: i32) -> (i32, i32) {
    %c0_i32 = arith.constant 0 : i32
    %c0_i32_0 = arith.constant 0 : i32
    return %arg1, %c0_i32 : i32, i32
  }
  func.func @transform_2(%arg0: i32, %arg1: i32) -> (i32, i32, i32) {
    %c0_i32 = arith.constant 0 : i32
    %c0_i32_0 = arith.constant 0 : i32
    %c0_i32_1 = arith.constant 0 : i32
    return %arg0, %c0_i32, %c0_i32_0 : i32, i32, i32
  }
  func.func @transform_3(%arg0: i32, %arg1: i32) -> (i32, i32) {
    %c0_i32 = arith.constant 0 : i32
    %c0_i32_0 = arith.constant 0 : i32
    %c0_i32_1 = arith.constant 0 : i32
    return %c0_i32, %c0_i32_0 : i32, i32
  }
  func.func @transform_4(%arg0: i32, %arg1: i32) -> (i32, i32) {
    %c0_i32 = arith.constant 0 : i32
    %c0_i32_0 = arith.constant 0 : i32
    %c0_i32_1 = arith.constant 0 : i32
    return %c0_i32, %c0_i32_0 : i32, i32
  }
  func.func @transform_5(%arg0: i32, %arg1: i32) -> (i32, i32) {
    %c0_i32 = arith.constant 0 : i32
    %c0_i32_0 = arith.constant 0 : i32
    %c0_i32_1 = arith.constant 0 : i32
    return %c0_i32, %c0_i32_0 : i32, i32
  }
  func.func @transform_6(%arg0: i32, %arg1: i32) -> (i32, i32, i32, i32) {
    %c0_i32 = arith.constant 0 : i32
    %c0_i32_0 = arith.constant 0 : i32
    %c0_i32_1 = arith.constant 0 : i32
    return %arg0, %c0_i32, %arg1, %c0_i32_0 : i32, i32, i32, i32
  }
}

</mosaic_0001>

<llo_original>
// kernel: neg.3
$region0: #{neg.3}
  #allocation0 [shape = 's32[1]{0}', space=sflag, size = 0x4, scoped, tag = 'scoped memory for neg.3']
  %s0 = inlined_call_operand.vmem [shape: f32[2,3,2], index: 0, kind: input, shape index: {}]
  %s1 = inlined_call_operand.vmem [shape: bf16[2,3,2], index: 1, kind: output, shape index: {}]
  %v2 = vld [vmem:[%s0] sm:$0x7]
  %3 = xla_tuple %v2
  %4 = xla_tuple %3
  %v5 = vxor.u32 %v2, 2147483648
  %6 = xla_tuple %v5
  %v7 = vpack.c.bf16 0.0, %v5
  %8 = vst [vmem:[%s1] sm:$0x3] %v7
  %s9 = scalar_lea.vmem %s0, 4
  %v10 = vld [vmem:[%s9] sm:$0x7]
  %11 = xla_tuple %v10
  %12 = xla_tuple %11
  %v13 = vxor.u32 %v10, 2147483648
  %14 = xla_tuple %v13
  %s15 = scalar_lea.vmem %s1, 2
  %v16 = vpack.c.bf16 0.0, %v13
  %17 = vst [vmem:[%s15] sm:$0x3] %v16

// kernel: neg.2
$region0: #{neg.2}
  #allocation0 [shape = 's32[1]{0}', space=sflag, size = 0x4, scoped, tag = 'scoped memory for neg.2']
  %s0 = inlined_call_operand.vmem [shape: f32[64,2], index: 0, kind: input, shape index: {}]
  %s1 = inlined_call_operand.vmem [shape: bf16[64,2], index: 1, kind: output, shape index: {}]
  %v2 = vld [vmem:[%s0] sm:$0x3]
  %3 = xla_tuple %v2
  %4 = xla_tuple %3
  %v5 = vxor.u32 %v2, 2147483648
  %6 = xla_tuple %v5
  %v7 = vpack.c.bf16 0.0, %v5
  %8 = vst [vmem:[%s1] sm:$0x1] %v7

// kernel: encoder_pos_embedding_forward.1
$region0: #{encoder_pos_embedding_forward.1}
  #allocation0 [shape = 'u32[]', space=smem, size = 0x4, offset = 0x4, fixed_abs, tag = 'smem constant byte address 0x4 - core index']
  #allocation1 [shape = 'u32[144,128]{1,0:T(1,128)}', space=vmem, size = 0x12000, scoped, tag = 'internal scratch']
  %s0 = inlined_call_operand.vmem [shape: f32[2,64,64], index: 0, kind: input, shape index: {}]
  %s1 = inlined_call_operand.vmem [shape: f32[64,64], index: 1, kind: input, shape index: {}]
  %s2 = inlined_call_operand.vmem [shape: f32[2,3,64], index: 2, kind: input, shape index: {}]
  %s3 = inlined_call_operand.vmem [shape: f32[64,128], index: 3, kind: input, shape index: {}]
  %s4 = inlined_call_operand.vmem [shape: f32[64,64], index: 4, kind: input, shape index: {}]
  %s5 = inlined_call_operand.vmem [shape: f32[1,64], index: 5, kind: input, shape index: {}]
  %s6 = inlined_call_operand.vmem [shape: f32[2,3,64,128], index: 6, kind: output, shape index: {}]
  %s7 = sld [smem:[#allocation0]]
  $region57: #{encoder_pos_embedding_forward.1} parent=0
    _
  %s9 = ssub.s32 1, %s7
  %s10 = scalar_select 0, %s9, %s7
  loop: start=0, step=1, limit=4
  $region2: #{encoder_pos_embedding_forward.1} parent=0 // loop_pre_header
    _
  $region3: #{encoder_pos_embedding_forward.1} parent=0 // loop_header
    %s12 = sphi 0, %s16
    %p13 = scmp.ge.s32.totalorder %s12, 4
    %s19 = sphi 0, %s31
    %s20 = sphi 0, %s27
    %s21 = sphi 0, %s19
    %s22 = sphi 0, %s20
    %s23 = sphi 0, %s21
    %s24 = sphi 0, %s22
    %s36 = sphi 0, %s38
    %s39 = sphi 0, %s36
    %s40 = sphi 0, %s39
    %s56 = sphi 0, %s40
    %s62 = sphi 0, %s64
    %s65 = sphi 0, %s62
    %s66 = sphi 0, %s65
    %s82 = sphi 0, %s66
    %s88 = sphi 0, %s90
    %s91 = sphi 0, %s88
    %s92 = sphi 0, %s91
    %s108 = sphi 0, %s92
    %s112 = sphi 0, %s112
    %s114 = sphi 0, %s112
    %s115 = sphi 0, %s114
    %s129 = sphi 0, %s115
    %s133 = sphi 0, %s133
    %s135 = sphi 0, %s133
    %s136 = sphi 0, %s135
    %s150 = sphi 0, %s136
    %s154 = sphi 0, %s154
    %s156 = sphi 0, %s154
    %s157 = sphi 0, %s156
    %s171 = sphi 0, %s157
    %s179 = sphi 0, %s181
    %s182 = sphi 0, %s179
    %s183 = sphi 0, %s182
    %s199 = sphi 0, %s183
  $region4: #{encoder_pos_embedding_forward.1} parent=0 // loop_header_branch
    %15 = sbr.rel (%p13) target = $region8
  $region5: #{encoder_pos_embedding_forward.1} parent=0 // loop_body
    %s17 = ssub.s32 %s12, 1
    %s18 = ssub.s32 %s12, 2
    %s25 = sadd.s32 1, %s20
    %p26 = scmp.ge.s32.totalorder %s25, 1
    %s27 = scalar_select %p26, 0, %s25
    %s28 = sadd.s32 1, %s19
    %s29 = scalar_select %p26, %s28, %s19
    %p30 = scmp.ge.s32.totalorder %s29, 2
    %s31 = scalar_select %p30, 0, %s29
    %s32 = ssub.s32 %s19, %s31
    %s33 = ssub.s32 %s20, %s27
    %s34 = sor.u32 %s32, %s33
    %p35 = scmp.eq.s32.totalorder %s34, 0
    %s37 = sadd.s32 %s36, 1
    %s38 = scalar_select %p35, %s36, %s37
    %p41 = pneg %p35
    %p42 = scmp.eq.s32.totalorder %s12, 1
    %p43 = por %p41, %p42
    %p44 = scmp.ne.s32.totalorder %s36, %s39
    %p45 = scmp.eq.s32.totalorder %s12, 0
    %p46 = por %p44, %p45
    %p47 = scmp.ne.s32.totalorder %s36, %s39
    %p48 = scmp.eq.s32.totalorder %s17, 1
    %p49 = por %p47, %p48
    %p50 = scmp.ne.s32.totalorder %s39, %s40
    %p51 = scmp.eq.s32.totalorder %s17, 0
    %p52 = por %p50, %p51
    %p53 = scmp.ne.s32.totalorder %s39, %s40
    %p54 = scmp.eq.s32.totalorder %s18, 1
    %p55 = por %p53, %p54
    %p57 = scmp.ne.s32.totalorder %s40, %s56
    %p58 = scmp.eq.s32.totalorder %s18, 0
    %p59 = por %p57, %p58
    %s60 = ssub.s32 %s20, %s27
    %p61 = scmp.eq.s32.totalorder %s60, 0
    %s63 = sadd.s32 %s62, 1
    %s64 = scalar_select %p61, %s62, %s63
    %p67 = pneg %p61
    %p68 = scmp.eq.s32.totalorder %s12, 1
    %p69 = por %p67, %p68
    %p70 = scmp.ne.s32.totalorder %s62, %s65
    %p71 = scmp.eq.s32.totalorder %s12, 0
    %p72 = por %p70, %p71
    %p73 = scmp.ne.s32.totalorder %s62, %s65
    %p74 = scmp.eq.s32.totalorder %s17, 1
    %p75 = por %p73, %p74
    %p76 = scmp.ne.s32.totalorder %s65, %s66
    %p77 = scmp.eq.s32.totalorder %s17, 0
    %p78 = por %p76, %p77
    %p79 = scmp.ne.s32.totalorder %s65, %s66
    %p80 = scmp.eq.s32.totalorder %s18, 1
    %p81 = por %p79, %p80
    %p83 = scmp.ne.s32.totalorder %s66, %s82
    %p84 = scmp.eq.s32.totalorder %s18, 0
    %p85 = por %p83, %p84
    %s86 = ssub.s32 %s19, %s31
    %p87 = scmp.eq.s32.totalorder %s86, 0
    %s89 = sadd.s32 %s88, 1
    %s90 = scalar_select %p87, %s88, %s89
    %p93 = pneg %p87
    %p94 = scmp.eq.s32.totalorder %s12, 1
    %p95 = por %p93, %p94
    %p96 = scmp.ne.s32.totalorder %s88, %s91
    %p97 = scmp.eq.s32.totalorder %s12, 0
    %p98 = por %p96, %p97
    %p99 = scmp.ne.s32.totalorder %s88, %s91
    %p100 = scmp.eq.s32.totalorder %s17, 1
    %p101 = por %p99, %p100
    %p102 = scmp.ne.s32.totalorder %s91, %s92
    %p103 = scmp.eq.s32.totalorder %s17, 0
    %p104 = por %p102, %p103
    %p105 = scmp.ne.s32.totalorder %s91, %s92
    %p106 = scmp.eq.s32.totalorder %s18, 1
    %p107 = por %p105, %p106
    %p109 = scmp.ne.s32.totalorder %s92, %s108
    %p110 = scmp.eq.s32.totalorder %s18, 0
    %p111 = por %p109, %p110
    %s113 = sadd.s32 %s112, 1
    %p116 = scmp.eq.s32.totalorder %s12, 1
    %p117 = scmp.ne.s32.totalorder %s112, %s114
    %p118 = scmp.eq.s32.totalorder %s12, 0
    %p119 = por %p117, %p118
    %p120 = scmp.ne.s32.totalorder %s112, %s114
    %p121 = scmp.eq.s32.totalorder %s17, 1
    %p122 = por %p120, %p121
    %p123 = scmp.ne.s32.totalorder %s114, %s115
    %p124 = scmp.eq.s32.totalorder %s17, 0
    %p125 = por %p123, %p124
    %p126 = scmp.ne.s32.totalorder %s114, %s115
    %p127 = scmp.eq.s32.totalorder %s18, 1
    %p128 = por %p126, %p127
    %p130 = scmp.ne.s32.totalorder %s115, %s129
    %p131 = scmp.eq.s32.totalorder %s18, 0
    %p132 = por %p130, %p131
    %s134 = sadd.s32 %s133, 1
    %p137 = scmp.eq.s32.totalorder %s12, 1
    %p138 = scmp.ne.s32.totalorder %s133, %s135
    %p139 = scmp.eq.s32.totalorder %s12, 0
    %p140 = por %p138, %p139
    %p141 = scmp.ne.s32.totalorder %s133, %s135
    %p142 = scmp.eq.s32.totalorder %s17, 1
    %p143 = por %p141, %p142
    %p144 = scmp.ne.s32.totalorder %s135, %s136
    %p145 = scmp.eq.s32.totalorder %s17, 0
    %p146 = por %p144, %p145
    %p147 = scmp.ne.s32.totalorder %s135, %s136
    %p148 = scmp.eq.s32.totalorder %s18, 1
    %p149 = por %p147, %p148
    %p151 = scmp.ne.s32.totalorder %s136, %s150
    %p152 = scmp.eq.s32.totalorder %s18, 0
    %p153 = por %p151, %p152
    %s155 = sadd.s32 %s154, 1
    %p158 = scmp.eq.s32.totalorder %s12, 1
    %p159 = scmp.ne.s32.totalorder %s154, %s156
    %p160 = scmp.eq.s32.totalorder %s12, 0
    %p161 = por %p159, %p160
    %p162 = scmp.ne.s32.totalorder %s154, %s156
    %p163 = scmp.eq.s32.totalorder %s17, 1
    %p164 = por %p162, %p163
    %p165 = scmp.ne.s32.totalorder %s156, %s157
    %p166 = scmp.eq.s32.totalorder %s17, 0
    %p167 = por %p165, %p166
    %p168 = scmp.ne.s32.totalorder %s156, %s157
    %p169 = scmp.eq.s32.totalorder %s18, 1
    %p170 = por %p168, %p169
    %p172 = scmp.ne.s32.totalorder %s157, %s171
    %p173 = scmp.eq.s32.totalorder %s18, 0
    %p174 = por %p172, %p173
    %s175 = ssub.s32 %s19, %s31
    %s176 = ssub.s32 %s20, %s27
    %s177 = sor.u32 %s175, %s176
    %p178 = scmp.eq.s32.totalorder %s177, 0
    %s180 = sadd.s32 %s179, 1
    %s181 = scalar_select %p178, %s179, %s180
    %p184 = pneg %p178
    %p185 = scmp.eq.s32.totalorder %s12, 1
    %p186 = por %p184, %p185
    %p187 = scmp.ne.s32.totalorder %s179, %s182
    %p188 = scmp.eq.s32.totalorder %s12, 0
    %p189 = por %p187, %p188
    %p190 = scmp.ne.s32.totalorder %s179, %s182
    %p191 = scmp.eq.s32.totalorder %s17, 1
    %p192 = por %p190, %p191
    %p193 = scmp.ne.s32.totalorder %s182, %s183
    %p194 = scmp.eq.s32.totalorder %s17, 0
    %p195 = por %p193, %p194
    %p196 = scmp.ne.s32.totalorder %s182, %s183
    %p197 = scmp.eq.s32.totalorder %s18, 1
    %p198 = por %p196, %p197
    %p200 = scmp.ne.s32.totalorder %s183, %s199
    %p201 = scmp.eq.s32.totalorder %s18, 0
    %p202 = por %p200, %p201
    %p203 = scmp.le.s32.totalorder 1, %s12
    %p204 = scmp.lt.s32.totalorder %s12, 3
    %p205 = pnand %p203, %p204
    %p206 = pneg %p205
    // Predicated region
    $region9: #{encoder_pos_embedding_forward.1} parent=5 // pred_check
      _
    $region10: #{encoder_pos_embedding_forward.1} parent=5 // pred_check_branch
      %208 = sbr.rel (%p205) target = $region12
    $region11: #{encoder_pos_embedding_forward.1} parent=5 // pred_region
      %s209 = ssub.s32 %s12, 1
      // Predicated region
      $region13: #{encoder_pos_embedding_forward.1} parent=11 // pred_check
        %p210 = pneg %p78
      $region14: #{encoder_pos_embedding_forward.1} parent=11 // pred_check_branch
        %212 = sbr.rel (%p210) target = $region16
      $region15: #{encoder_pos_embedding_forward.1} parent=11 // pred_region
        %s213 = smul.u32 8, %s22
        %p214 = scmp.lt.s32.totalorder %s213, 7
        %s215 = scalar_select %p214, %s213, 7
        %s216 = smul.addr %s215, 8
        %s217 = scalar_lea.vmem %s1, %s216
        %s218 = smul.u32 8, %s22
      $region16: #{encoder_pos_embedding_forward.1} parent=11 // pred_fallthru
        _
      // Predicated region
      $region17: #{encoder_pos_embedding_forward.1} parent=11 // pred_check
        %p219 = pneg %p125
      $region18: #{encoder_pos_embedding_forward.1} parent=11 // pred_check_branch
        %221 = sbr.rel (%p219) target = $region20
      $region19: #{encoder_pos_embedding_forward.1} parent=11 // pred_region
        _
      $region20: #{encoder_pos_embedding_forward.1} parent=11 // pred_fallthru
        _
      // Predicated region
      $region21: #{encoder_pos_embedding_forward.1} parent=11 // pred_check
        %p222 = pneg %p146
      $region22: #{encoder_pos_embedding_forward.1} parent=11 // pred_check_branch
        %224 = sbr.rel (%p222) target = $region24
      $region23: #{encoder_pos_embedding_forward.1} parent=11 // pred_region
        _
      $region24: #{encoder_pos_embedding_forward.1} parent=11 // pred_fallthru
        _
      // Predicated region
      $region25: #{encoder_pos_embedding_forward.1} parent=11 // pred_check
        %p225 = pneg %p167
      $region26: #{encoder_pos_embedding_forward.1} parent=11 // pred_check_branch
        %227 = sbr.rel (%p225) target = $region28
      $region27: #{encoder_pos_embedding_forward.1} parent=11 // pred_region
        _
      $region28: #{encoder_pos_embedding_forward.1} parent=11 // pred_fallthru
        _
    $region12: #{encoder_pos_embedding_forward.1} parent=5 // pred_fallthru
      _
    %p228 = scmp.lt.s32.totalorder %s12, 2
    // Predicated region
    $region29: #{encoder_pos_embedding_forward.1} parent=5 // pred_check
      %p229 = pneg %p228
    $region30: #{encoder_pos_embedding_forward.1} parent=5 // pred_check_branch
      %231 = sbr.rel (%p229) target = $region32
    $region31: #{encoder_pos_embedding_forward.1} parent=5 // pred_region
      // Predicated region
      $region33: #{encoder_pos_embedding_forward.1} parent=31 // pred_check
        %p232 = pneg %p46
      $region34: #{encoder_pos_embedding_forward.1} parent=31 // pred_check_branch
        %234 = sbr.rel (%p232) target = $region36
      $region35: #{encoder_pos_embedding_forward.1} parent=31 // pred_region
        %s235 = smul.u32 8, %s20
        %p236 = scmp.lt.s32.totalorder %s19, 1
        %s237 = scalar_select %p236, %s19, 1
        %p238 = scmp.lt.s32.totalorder %s235, 7
        %s239 = scalar_select %p238, %s235, 7
        %s240 = smul.addr %s237, 8
        %s241 = sadd.s32 %s239, %s240
        %s242 = smul.addr %s241, 8
        %s243 = scalar_lea.vmem %s0, %s242
        %s244 = smul.u32 8, %s20
      $region36: #{encoder_pos_embedding_forward.1} parent=31 // pred_fallthru
        _
      // Predicated region
      $region37: #{encoder_pos_embedding_forward.1} parent=31 // pred_check
        %p245 = pneg %p98
      $region38: #{encoder_pos_embedding_forward.1} parent=31 // pred_check_branch
        %247 = sbr.rel (%p245) target = $region40
      $region39: #{encoder_pos_embedding_forward.1} parent=31 // pred_region
        %p248 = scmp.lt.s32.totalorder %s19, 1
        %s249 = scalar_select %p248, %s19, 1
        %s250 = smul.addr %s249, 4
        %s251 = scalar_lea.vmem %s2, %s250
      $region40: #{encoder_pos_embedding_forward.1} parent=31 // pred_fallthru
        _
    $region32: #{encoder_pos_embedding_forward.1} parent=5 // pred_fallthru
      _
    %p252 = scmp.le.s32.totalorder 1, %s12
    %p253 = scmp.lt.s32.totalorder %s12, 3
    %p254 = pnand %p252, %p253
    %p255 = pneg %p254
    // Predicated region
    $region41: #{encoder_pos_embedding_forward.1} parent=5 // pred_check
      _
    $region42: #{encoder_pos_embedding_forward.1} parent=5 // pred_check_branch
      %257 = sbr.rel (%p254) target = $region44
    $region43: #{encoder_pos_embedding_forward.1} parent=5 // pred_region
      %s258 = ssub.s32 %s12, 1
      %s259 = smul.u32 8, %s22
      %p260 = scmp.lt.s32.totalorder %s21, 1
      %s261 = scalar_select %p260, %s21, 1
      %p262 = scmp.lt.s32.totalorder %s259, 7
      %s263 = scalar_select %p262, %s259, 7
      %s264 = smul.addr %s261, 8
      %s265 = sadd.s32 %s263, %s264
      %s266 = smul.addr %s265, 8
      %s267 = scalar_lea.vmem %s0, %s266
      %p268 = pneg %p52
      %p269 = pneg %p49
      %s270 = smul.u32 8, %s22
      %p271 = scmp.lt.s32.totalorder %s270, 7
      %s272 = scalar_select %p271, %s270, 7
      %s273 = smul.addr %s272, 8
      %s274 = scalar_lea.vmem %s1, %s273
      %p275 = pneg %p78
      %p276 = pneg %p75
      %p277 = scmp.lt.s32.totalorder %s21, 1
      %s278 = scalar_select %p277, %s21, 1
      %s279 = smul.addr %s278, 4
      %s280 = scalar_lea.vmem %s2, %s279
      %p281 = pneg %p104
      %p282 = pneg %p101
      %p283 = pneg %p125
      %p284 = pneg %p122
      %p285 = pneg %p146
      %p286 = pneg %p143
      %p287 = pneg %p167
      %p288 = pneg %p164
      %p289 = pneg %p195
      %p290 = pneg %p192
      %s291 = smul.u32 8, %s22
      %p292 = scmp.lt.s32.totalorder %s21, 1
      %s293 = scalar_select %p292, %s21, 1
      %p294 = scmp.lt.s32.totalorder %s291, 7
      %s295 = scalar_select %p294, %s291, 7
      %s296 = smul.addr %s293, 24
      %s297 = sadd.s32 %s295, %s296
      %s298 = smul.addr %s297, 8
      %s299 = scalar_lea.vmem %s6, %s298
      %s300 = smul.u32 8, %s22
      %p301 = scmp.lt.s32.totalorder %s21, 1
      %s302 = scalar_select %p301, %s21, 1
      %p303 = scmp.lt.s32.totalorder %s300, 7
      %s304 = scalar_select %p303, %s300, 7
      %s305 = smul.addr %s302, 8
      %s306 = sadd.s32 %s304, %s305
      %s307 = smul.addr %s306, 8
      %s308 = scalar_lea.vmem %s0, %s307
      %s309 = smul.u32 8, %s22
      %s310 = smul.u32 8, %s22
      %p311 = scmp.lt.s32.totalorder %s310, 7
      %s312 = scalar_select %p311, %s310, 7
      %s313 = smul.addr %s312, 8
      %s314 = scalar_lea.vmem %s1, %s313
      %s315 = smul.u32 8, %s22
      %p316 = scmp.lt.s32.totalorder %s21, 1
      %s317 = scalar_select %p316, %s21, 1
      %s318 = smul.addr %s317, 4
      %s319 = scalar_lea.vmem %s2, %s318
      %s320 = smul.u32 8, %s22
      %p321 = scmp.lt.s32.totalorder %s21, 1
      %s322 = scalar_select %p321, %s21, 1
      %p323 = scmp.lt.s32.totalorder %s320, 7
      %s324 = scalar_select %p323, %s320, 7
      %s325 = smul.addr %s322, 24
      %s326 = sadd.s32 %s324, %s325
      %s327 = smul.addr %s326, 8
      %s328 = scalar_lea.vmem %s6, %s327
      %s329 = smul.u32 8, %s22
      %v330 = vld [vmem:[%s308] sm:$0xff]
      %v331 = vld [vmem:[%s308 + $0x8] sm:$0xff]
      %v332 = vld [vmem:[%s308 + $0x10] sm:$0xff]
      %v333 = vld [vmem:[%s308 + $0x18] sm:$0xff]
      %v334 = vld [vmem:[%s308 + $0x20] sm:$0xff]
      %v335 = vld [vmem:[%s308 + $0x28] sm:$0xff]
      %v336 = vld [vmem:[%s308 + $0x30] sm:$0xff]
      %v337 = vld [vmem:[%s308 + $0x38] sm:$0xff]
      %v338 = vld [vmem:[%s3] sm:$0xff]
      %v339 = vld [vmem:[%s3 + $0x8] sm:$0xff]
      %v340 = vld [vmem:[%s3 + $0x10] sm:$0xff]
      %v341 = vld [vmem:[%s3 + $0x18] sm:$0xff]
      %v342 = vld [vmem:[%s3 + $0x20] sm:$0xff]
      %v343 = vld [vmem:[%s3 + $0x28] sm:$0xff]
      %v344 = vld [vmem:[%s3 + $0x30] sm:$0xff]
      %v345 = vld [vmem:[%s3 + $0x38] sm:$0xff]
      %vm346 = vcmask 523264
      %v348 = vsel %vm346, %v330, 0
      %v351 = vsel %vm346, %v331, 0
      %v354 = vsel %vm346, %v332, 0
      %v357 = vsel %vm346, %v333, 0
      %v360 = vsel %vm346, %v334, 0
      %v363 = vsel %vm346, %v335, 0
      %v366 = vsel %vm346, %v336, 0
      %v369 = vsel %vm346, %v337, 0
      %371 = vmatprep.subr.mxu0 0.0
      %372 = vmatpush1.msra.mxu0 %v338
      %373 = vmatprep.subr.mxu0 0.0
      %374 = vmatpush1.msra.mxu0 %v339
      %375 = vmatprep.subr.mxu0 0.0
      %376 = vmatpush1.msra.mxu0 %v340
      %377 = vmatprep.subr.mxu0 0.0
      %378 = vmatpush1.msra.mxu0 %v341
      %379 = vmatprep.subr.mxu0 0.0
      %380 = vmatpush1.msra.mxu0 %v342
      %381 = vmatprep.subr.mxu0 0.0
      %382 = vmatpush1.msra.mxu0 %v343
      %383 = vmatprep.subr.mxu0 0.0
      %384 = vmatpush1.msra.mxu0 %v344
      %385 = vmatprep.subr.mxu0 0.0
      %386 = vmatpush1.msra.mxu0 %v345
      %387 = vmatprep.subr.mxu0 0.0
      %388 = vmatpush1.msra.mxu0 0.0
      %389 = vmatprep.subr.mxu0 0.0
      %390 = vmatpush1.msra.mxu0 0.0
      %391 = vmatprep.subr.mxu0 0.0
      %392 = vmatpush1.msra.mxu0 0.0
      %393 = vmatprep.subr.mxu0 0.0
      %394 = vmatpush1.msra.mxu0 0.0
      %395 = vmatprep.subr.mxu0 0.0
      %396 = vmatpush1.msra.mxu0 0.0
      %397 = vmatprep.subr.mxu0 0.0
      %398 = vmatpush1.msra.mxu0 0.0
      %399 = vmatprep.subr.mxu0 0.0
      %400 = vmatpush1.msra.mxu0 0.0
      %401 = vmatprep.subr.mxu0 0.0
      %402 = vmatpush1.msra.mxu0 0.0
      %403 = vmatprep.subr.mxu0 0.0
      %404 = vmatpush1.msra.mxu0 0.0
      %405 = vmatprep.subr.mxu0 0.0
      %406 = vmatpush1.msra.mxu0 0.0
      %407 = vmatprep.subr.mxu0 0.0
      %408 = vmatpush1.msra.mxu0 0.0
      %409 = vmatprep.subr.mxu0 0.0
      %410 = vmatpush1.msra.mxu0 0.0
      %411 = vmatprep.subr.mxu0 0.0
      %412 = vmatpush1.msra.mxu0 0.0
      %413 = vmatprep.subr.mxu0 0.0
      %414 = vmatpush1.msra.mxu0 0.0
      %415 = vmatprep.subr.mxu0 0.0
      %416 = vmatpush1.msra.mxu0 0.0
      %417 = vmatprep.subr.mxu0 0.0
      %418 = vmatpush1.msra.mxu0 0.0
      %419 = vmatprep.subr.mxu0 0.0
      %420 = vmatpush1.msra.mxu0 0.0
      %421 = vmatprep.subr.mxu0 0.0
      %422 = vmatpush1.msra.mxu0 0.0
      %423 = vmatprep.subr.mxu0 0.0
      %424 = vmatpush1.msra.mxu0 0.0
      %425 = vmatprep.subr.mxu0 0.0
      %426 = vmatpush1.msra.mxu0 0.0
      %427 = vmatprep.subr.mxu0 0.0
      %428 = vmatpush1.msra.mxu0 0.0
      %429 = vmatprep.subr.mxu0 0.0
      %430 = vmatpush1.msra.mxu0 0.0
      %431 = vmatprep.subr.mxu0 0.0
      %432 = vmatpush1.msra.mxu0 0.0
      %433 = vmatprep.subr.mxu0 0.0
      %434 = vmatpush1.msra.mxu0 0.0
      %435 = vmatprep.mubr.f32.mxu0 0.0
      %436 = vmatmul.mubr.f32.gmra.mrb[0].mxu0 %v348
      %v437 = vpop.f32.mrb[0].mxu0
      %v438 = vadd.f32 0.0, %v437
      %v439 = vpop.f32.mrb[0].mxu0
      %440 = vmatprep.mubr.f32.mxu0 0.0
      %441 = vmatmul.mubr.f32.gmra.mrb[0].mxu0 %v351
      %v442 = vpop.f32.mrb[0].mxu0
      %v443 = vadd.f32 0.0, %v442
      %v444 = vpop.f32.mrb[0].mxu0
      %445 = vmatprep.mubr.f32.mxu0 0.0
      %446 = vmatmul.mubr.f32.gmra.mrb[0].mxu0 %v354
      %v447 = vpop.f32.mrb[0].mxu0
      %v448 = vadd.f32 0.0, %v447
      %v449 = vpop.f32.mrb[0].mxu0
      %450 = vmatprep.mubr.f32.mxu0 0.0
      %451 = vmatmul.mubr.f32.gmra.mrb[0].mxu0 %v357
      %v452 = vpop.f32.mrb[0].mxu0
      %v453 = vadd.f32 0.0, %v452
      %v454 = vpop.f32.mrb[0].mxu0
      %455 = vmatprep.mubr.f32.mxu0 0.0
      %456 = vmatmul.mubr.f32.gmra.mrb[0].mxu0 %v360
      %v457 = vpop.f32.mrb[0].mxu0
      %v458 = vadd.f32 0.0, %v457
      %v459 = vpop.f32.mrb[0].mxu0
      %460 = vmatprep.mubr.f32.mxu0 0.0
      %461 = vmatmul.mubr.f32.gmra.mrb[0].mxu0 %v363
      %v462 = vpop.f32.mrb[0].mxu0
      %v463 = vadd.f32 0.0, %v462
      %v464 = vpop.f32.mrb[0].mxu0
      %465 = vmatprep.mubr.f32.mxu0 0.0
      %466 = vmatmul.mubr.f32.gmra.mrb[0].mxu0 %v366
      %v467 = vpop.f32.mrb[0].mxu0
      %v468 = vadd.f32 0.0, %v467
      %v469 = vpop.f32.mrb[0].mxu0
      %470 = vmatprep.mubr.f32.mxu0 0.0
      %471 = vmatmul.mubr.f32.gmra.mrb[0].mxu0 %v369
      %v472 = vpop.f32.mrb[0].mxu0
      %v473 = vadd.f32 0.0, %v472
      %v474 = vpop.f32.mrb[0].mxu0
      %475 = vdwg.mxu0
      %v476 = vld [vmem:[%s314] sm:$0xff]
      %v477 = vld [vmem:[%s314 + $0x8] sm:$0xff]
      %v478 = vld [vmem:[%s314 + $0x10] sm:$0xff]
      %v479 = vld [vmem:[%s314 + $0x18] sm:$0xff]
      %v480 = vld [vmem:[%s314 + $0x20] sm:$0xff]
      %v481 = vld [vmem:[%s314 + $0x28] sm:$0xff]
      %v482 = vld [vmem:[%s314 + $0x30] sm:$0xff]
      %v483 = vld [vmem:[%s314 + $0x38] sm:$0xff]
      %v484 = vadd.f32 %v438, %v476
      %v485 = vadd.f32 %v443, %v477
      %v486 = vadd.f32 %v448, %v478
      %v487 = vadd.f32 %v453, %v479
      %v488 = vadd.f32 %v458, %v480
      %v489 = vadd.f32 %v463, %v481
      %v490 = vadd.f32 %v468, %v482
      %v491 = vadd.f32 %v473, %v483
      %500 = vrot.lane.b32.xlu0 %v476, 64
      %v501 = vpop.permute.xlu0 %500
      %502 = vrot.lane.b32.xlu0 %v477, 64
      %v503 = vpop.permute.xlu0 %502
      %504 = vrot.lane.b32.xlu0 %v478, 64
      %v505 = vpop.permute.xlu0 %504
      %506 = vrot.lane.b32.xlu0 %v479, 64
      %v507 = vpop.permute.xlu0 %506
      %508 = vrot.lane.b32.xlu0 %v480, 64
      %v509 = vpop.permute.xlu0 %508
      %510 = vrot.lane.b32.xlu0 %v481, 64
      %v511 = vpop.permute.xlu0 %510
      %512 = vrot.lane.b32.xlu0 %v482, 64
      %v513 = vpop.permute.xlu0 %512
      %514 = vrot.lane.b32.xlu0 %v483, 64
      %v515 = vpop.permute.xlu0 %514
      %v524 = vadd.f32 %v438, %v501
      %v525 = vadd.f32 %v443, %v503
      %v526 = vadd.f32 %v448, %v505
      %v527 = vadd.f32 %v453, %v507
      %v528 = vadd.f32 %v458, %v509
      %v529 = vadd.f32 %v463, %v511
      %v530 = vadd.f32 %v468, %v513
      %v531 = vadd.f32 %v473, %v515
      %540 = vrot.lane.b32.xlu0 %v524, 64
      %v541 = vpop.permute.xlu0 %540
      %542 = vrot.lane.b32.xlu0 %v525, 64
      %v543 = vpop.permute.xlu0 %542
      %544 = vrot.lane.b32.xlu0 %v526, 64
      %v545 = vpop.permute.xlu0 %544
      %546 = vrot.lane.b32.xlu0 %v527, 64
      %v547 = vpop.permute.xlu0 %546
      %548 = vrot.lane.b32.xlu0 %v528, 64
      %v549 = vpop.permute.xlu0 %548
      %550 = vrot.lane.b32.xlu0 %v529, 64
      %v551 = vpop.permute.xlu0 %550
      %552 = vrot.lane.b32.xlu0 %v530, 64
      %v553 = vpop.permute.xlu0 %552
      %554 = vrot.lane.b32.xlu0 %v531, 64
      %v555 = vpop.permute.xlu0 %554
      %v564 = vsel %vm346, %v484, 0.0
      %565 = vadd.xlane.f32.xlu0 %v564
      %v566 = vpop.xlane.xlu0 %565
      %v567 = vsel %vm346, %v485, 0.0
      %568 = vadd.xlane.f32.xlu0 %v567
      %v569 = vpop.xlane.xlu0 %568
      %v570 = vsel %vm346, %v486, 0.0
      %571 = vadd.xlane.f32.xlu0 %v570
      %v572 = vpop.xlane.xlu0 %571
      %v573 = vsel %vm346, %v487, 0.0
      %574 = vadd.xlane.f32.xlu0 %v573
      %v575 = vpop.xlane.xlu0 %574
      %v576 = vsel %vm346, %v488, 0.0
      %577 = vadd.xlane.f32.xlu0 %v576
      %v578 = vpop.xlane.xlu0 %577
      %v579 = vsel %vm346, %v489, 0.0
      %580 = vadd.xlane.f32.xlu0 %v579
      %v581 = vpop.xlane.xlu0 %580
      %v582 = vsel %vm346, %v490, 0.0
      %583 = vadd.xlane.f32.xlu0 %v582
      %v584 = vpop.xlane.xlu0 %583
      %v585 = vsel %vm346, %v491, 0.0
      %586 = vadd.xlane.f32.xlu0 %v585
      %v587 = vpop.xlane.xlu0 %586
      %v588 = vsel %vm346, %v541, 0.0
      %589 = vadd.xlane.f32.xlu0 %v588
      %v590 = vpop.xlane.xlu0 %589
      %v591 = vsel %vm346, %v543, 0.0
      %592 = vadd.xlane.f32.xlu0 %v591
      %v593 = vpop.xlane.xlu0 %592
      %v594 = vsel %vm346, %v545, 0.0
      %595 = vadd.xlane.f32.xlu0 %v594
      %v596 = vpop.xlane.xlu0 %595
      %v597 = vsel %vm346, %v547, 0.0
      %598 = vadd.xlane.f32.xlu0 %v597
      %v599 = vpop.xlane.xlu0 %598
      %v600 = vsel %vm346, %v549, 0.0
      %601 = vadd.xlane.f32.xlu0 %v600
      %v602 = vpop.xlane.xlu0 %601
      %v603 = vsel %vm346, %v551, 0.0
      %604 = vadd.xlane.f32.xlu0 %v603
      %v605 = vpop.xlane.xlu0 %604
      %v606 = vsel %vm346, %v553, 0.0
      %607 = vadd.xlane.f32.xlu0 %v606
      %v608 = vpop.xlane.xlu0 %607
      %v609 = vsel %vm346, %v555, 0.0
      %610 = vadd.xlane.f32.xlu0 %v609
      %v611 = vpop.xlane.xlu0 %610
      %v612 = vrcp.pop 64.0
      %v613 = vmul.f32 %v566, %v612
      %v614 = vmul.f32 %v569, %v612
      %v615 = vmul.f32 %v572, %v612
      %v616 = vmul.f32 %v575, %v612
      %v617 = vmul.f32 %v578, %v612
      %v618 = vmul.f32 %v581, %v612
      %v619 = vmul.f32 %v584, %v612
      %v620 = vmul.f32 %v587, %v612
      %v621 = vmul.f32 %v590, %v612
      %v622 = vmul.f32 %v593, %v612
      %v623 = vmul.f32 %v596, %v612
      %v624 = vmul.f32 %v599, %v612
      %v625 = vmul.f32 %v602, %v612
      %v626 = vmul.f32 %v605, %v612
      %v627 = vmul.f32 %v608, %v612
      %v628 = vmul.f32 %v611, %v612
      %v629 = vsub.f32 %v484, %v613
      %v630 = vsub.f32 %v485, %v614
      %v631 = vsub.f32 %v486, %v615
      %v632 = vsub.f32 %v487, %v616
      %v633 = vsub.f32 %v488, %v617
      %v634 = vsub.f32 %v489, %v618
      %v635 = vsub.f32 %v490, %v619
      %v636 = vsub.f32 %v491, %v620
      %v637 = vsub.f32 %v541, %v621
      %v638 = vsub.f32 %v543, %v622
      %v639 = vsub.f32 %v545, %v623
      %v640 = vsub.f32 %v547, %v624
      %v641 = vsub.f32 %v549, %v625
      %v642 = vsub.f32 %v551, %v626
      %v643 = vsub.f32 %v553, %v627
      %v644 = vsub.f32 %v555, %v628
      %v645 = vld [vmem:[%s319] sm:$0x7]
      %v646 = vld [vmem:[%s4] sm:$0xff]
      %v647 = vld [vmem:[%s4 + $0x8] sm:$0xff]
      %v648 = vld [vmem:[%s4 + $0x10] sm:$0xff]
      %v649 = vld [vmem:[%s4 + $0x18] sm:$0xff]
      %v650 = vld [vmem:[%s4 + $0x20] sm:$0xff]
      %v651 = vld [vmem:[%s4 + $0x28] sm:$0xff]
      %v652 = vld [vmem:[%s4 + $0x30] sm:$0xff]
      %v653 = vld [vmem:[%s4 + $0x38] sm:$0xff]
      %v654 = vld [vmem:[%s5] sm:$0x1]
      %vm655 = vcmask 516096
      %v656 = vsel %vm655, %v645, 0.0
      %657 = vadd.xlane.f32.xlu0 %v656
      %v658 = vpop.xlane.xlu0 %657
      %v659 = vmul.f32 %v658, %v612
      %v660 = vsub.f32 %v645, %v659
      %v661 = vlaneseq
      %v662 = vshrl.u32 %v661, 7
      %v663 = vsub.s32 0, %v662
      %v664 = vrot.slane %v660, %v663
      %v665 = vsub.f32 %v629, %v664
      %v666 = vsub.f32 %v630, %v664
      %v667 = vsub.f32 %v631, %v664
      %v668 = vsub.f32 %v632, %v664
      %v669 = vsub.f32 %v633, %v664
      %v670 = vsub.f32 %v634, %v664
      %v671 = vsub.f32 %v635, %v664
      %v672 = vsub.f32 %v636, %v664
      %v673 = vsub.f32 %v637, %v664
      %v674 = vsub.f32 %v638, %v664
      %v675 = vsub.f32 %v639, %v664
      %v676 = vsub.f32 %v640, %v664
      %v677 = vsub.f32 %v641, %v664
      %v678 = vsub.f32 %v642, %v664
      %v679 = vsub.f32 %v643, %v664
      %v680 = vsub.f32 %v644, %v664
      %v681 = vmul.f32 %v665, %v665
      %v682 = vmul.f32 %v666, %v666
      %v683 = vmul.f32 %v667, %v667
      %v684 = vmul.f32 %v668, %v668
      %v685 = vmul.f32 %v669, %v669
      %v686 = vmul.f32 %v670, %v670
      %v687 = vmul.f32 %v671, %v671
      %v688 = vmul.f32 %v672, %v672
      %v689 = vmul.f32 %v673, %v673
      %v690 = vmul.f32 %v674, %v674
      %v691 = vmul.f32 %v675, %v675
      %v692 = vmul.f32 %v676, %v676
      %v693 = vmul.f32 %v677, %v677
      %v694 = vmul.f32 %v678, %v678
      %v695 = vmul.f32 %v679, %v679
      %v696 = vmul.f32 %v680, %v680
      %v697 = vsel %vm346, %v681, 0.0
      %698 = vadd.xlane.f32.xlu0 %v697
      %v699 = vpop.xlane.xlu0 %698
      %v700 = vsel %vm346, %v682, 0.0
      %701 = vadd.xlane.f32.xlu0 %v700
      %v702 = vpop.xlane.xlu0 %701
      %v703 = vsel %vm346, %v683, 0.0
      %704 = vadd.xlane.f32.xlu0 %v703
      %v705 = vpop.xlane.xlu0 %704
      %v706 = vsel %vm346, %v684, 0.0
      %707 = vadd.xlane.f32.xlu0 %v706
      %v708 = vpop.xlane.xlu0 %707
      %v709 = vsel %vm346, %v685, 0.0
      %710 = vadd.xlane.f32.xlu0 %v709
      %v711 = vpop.xlane.xlu0 %710
      %v712 = vsel %vm346, %v686, 0.0
      %713 = vadd.xlane.f32.xlu0 %v712
      %v714 = vpop.xlane.xlu0 %713
      %v715 = vsel %vm346, %v687, 0.0
      %716 = vadd.xlane.f32.xlu0 %v715
      %v717 = vpop.xlane.xlu0 %716
      %v718 = vsel %vm346, %v688, 0.0
      %719 = vadd.xlane.f32.xlu0 %v718
      %v720 = vpop.xlane.xlu0 %719
      %v721 = vsel %vm346, %v689, 0.0
      %722 = vadd.xlane.f32.xlu0 %v721
      %v723 = vpop.xlane.xlu0 %722
      %v724 = vsel %vm346, %v690, 0.0
      %725 = vadd.xlane.f32.xlu0 %v724
      %v726 = vpop.xlane.xlu0 %725
      %v727 = vsel %vm346, %v691, 0.0
      %728 = vadd.xlane.f32.xlu0 %v727
      %v729 = vpop.xlane.xlu0 %728
      %v730 = vsel %vm346, %v692, 0.0
      %731 = vadd.xlane.f32.xlu0 %v730
      %v732 = vpop.xlane.xlu0 %731
      %v733 = vsel %vm346, %v693, 0.0
      %734 = vadd.xlane.f32.xlu0 %v733
      %v735 = vpop.xlane.xlu0 %734
      %v736 = vsel %vm346, %v694, 0.0
      %737 = vadd.xlane.f32.xlu0 %v736
      %v738 = vpop.xlane.xlu0 %737
      %v739 = vsel %vm346, %v695, 0.0
      %740 = vadd.xlane.f32.xlu0 %v739
      %v741 = vpop.xlane.xlu0 %740
      %v742 = vsel %vm346, %v696, 0.0
      %743 = vadd.xlane.f32.xlu0 %v742
      %v744 = vpop.xlane.xlu0 %743
      %v745 = vmul.f32 %v699, %v612
      %v746 = vmul.f32 %v702, %v612
      %v747 = vmul.f32 %v705, %v612
      %v748 = vmul.f32 %v708, %v612
      %v749 = vmul.f32 %v711, %v612
      %v750 = vmul.f32 %v714, %v612
      %v751 = vmul.f32 %v717, %v612
      %v752 = vmul.f32 %v720, %v612
      %v753 = vmul.f32 %v723, %v612
      %v754 = vmul.f32 %v726, %v612
      %v755 = vmul.f32 %v729, %v612
      %v756 = vmul.f32 %v732, %v612
      %v757 = vmul.f32 %v735, %v612
      %v758 = vmul.f32 %v738, %v612
      %v759 = vmul.f32 %v741, %v612
      %v760 = vmul.f32 %v744, %v612
      %v761 = vadd.f32 %v745, 1e-05
      %v762 = vadd.f32 %v746, 1e-05
      %v763 = vadd.f32 %v747, 1e-05
      %v764 = vadd.f32 %v748, 1e-05
      %v765 = vadd.f32 %v749, 1e-05
      %v766 = vadd.f32 %v750, 1e-05
      %v767 = vadd.f32 %v751, 1e-05
      %v768 = vadd.f32 %v752, 1e-05
      %v769 = vadd.f32 %v753, 1e-05
      %v770 = vadd.f32 %v754, 1e-05
      %v771 = vadd.f32 %v755, 1e-05
      %v772 = vadd.f32 %v756, 1e-05
      %v773 = vadd.f32 %v757, 1e-05
      %v774 = vadd.f32 %v758, 1e-05
      %v775 = vadd.f32 %v759, 1e-05
      %v776 = vadd.f32 %v760, 1e-05
      %v777 = vrsqrt.pop %v761
      %v778 = vrsqrt.pop %v762
      %v779 = vrsqrt.pop %v763
      %v780 = vrsqrt.pop %v764
      %v781 = vrsqrt.pop %v765
      %v782 = vrsqrt.pop %v766
      %v783 = vrsqrt.pop %v767
      %v784 = vrsqrt.pop %v768
      %v785 = vrsqrt.pop %v769
      %v786 = vrsqrt.pop %v770
      %v787 = vrsqrt.pop %v771
      %v788 = vrsqrt.pop %v772
      %v789 = vrsqrt.pop %v773
      %v790 = vrsqrt.pop %v774
      %v791 = vrsqrt.pop %v775
      %v792 = vrsqrt.pop %v776
      %v793 = vmul.f32 %v665, %v777
      %v794 = vmul.f32 %v666, %v778
      %v795 = vmul.f32 %v667, %v779
      %v796 = vmul.f32 %v668, %v780
      %v797 = vmul.f32 %v669, %v781
      %v798 = vmul.f32 %v670, %v782
      %v799 = vmul.f32 %v671, %v783
      %v800 = vmul.f32 %v672, %v784
      %v801 = vmul.f32 %v673, %v785
      %v802 = vmul.f32 %v674, %v786
      %v803 = vmul.f32 %v675, %v787
      %v804 = vmul.f32 %v676, %v788
      %v805 = vmul.f32 %v677, %v789
      %v806 = vmul.f32 %v678, %v790
      %v807 = vmul.f32 %v679, %v791
      %v808 = vmul.f32 %v680, %v792
      %v810 = vlaneseq
      %v811 = vshrl.u32 %v810, 7
      %v812 = vsub.s32 0, %v811
      %v813 = vrot.slane %v654, %v812
      %v816 = vsel %vm346, %v793, 0
      %v819 = vsel %vm346, %v794, 0
      %v822 = vsel %vm346, %v795, 0
      %v825 = vsel %vm346, %v796, 0
      %v828 = vsel %vm346, %v797, 0
      %v831 = vsel %vm346, %v798, 0
      %v834 = vsel %vm346, %v799, 0
      %v837 = vsel %vm346, %v800, 0
      %v840 = vsel %vm346, %v801, 0
      %v843 = vsel %vm346, %v802, 0
      %v846 = vsel %vm346, %v803, 0
      %v849 = vsel %vm346, %v804, 0
      %v852 = vsel %vm346, %v805, 0
      %v855 = vsel %vm346, %v806, 0
      %v858 = vsel %vm346, %v807, 0
      %v861 = vsel %vm346, %v808, 0
      %863 = vmatprep.subr.mxu0 0.0
      %864 = vmatpush1.msra.mxu0 %v646
      %865 = vmatprep.subr.mxu0 0.0
      %866 = vmatpush1.msra.mxu0 %v647
      %867 = vmatprep.subr.mxu0 0.0
      %868 = vmatpush1.msra.mxu0 %v648
      %869 = vmatprep.subr.mxu0 0.0
      %870 = vmatpush1.msra.mxu0 %v649
      %871 = vmatprep.subr.mxu0 0.0
      %872 = vmatpush1.msra.mxu0 %v650
      %873 = vmatprep.subr.mxu0 0.0
      %874 = vmatpush1.msra.mxu0 %v651
      %875 = vmatprep.subr.mxu0 0.0
      %876 = vmatpush1.msra.mxu0 %v652
      %877 = vmatprep.subr.mxu0 0.0
      %878 = vmatpush1.msra.mxu0 %v653
      %879 = vmatprep.subr.mxu0 0.0
      %880 = vmatpush1.msra.mxu0 0.0
      %881 = vmatprep.subr.mxu0 0.0
      %882 = vmatpush1.msra.mxu0 0.0
      %883 = vmatprep.subr.mxu0 0.0
      %884 = vmatpush1.msra.mxu0 0.0
      %885 = vmatprep.subr.mxu0 0.0
      %886 = vmatpush1.msra.mxu0 0.0
      %887 = vmatprep.subr.mxu0 0.0
      %888 = vmatpush1.msra.mxu0 0.0
      %889 = vmatprep.subr.mxu0 0.0
      %890 = vmatpush1.msra.mxu0 0.0
      %891 = vmatprep.subr.mxu0 0.0
      %892 = vmatpush1.msra.mxu0 0.0
      %893 = vmatprep.subr.mxu0 0.0
      %894 = vmatpush1.msra.mxu0 0.0
      %895 = vmatprep.subr.mxu0 0.0
      %896 = vmatpush1.msra.mxu0 0.0
      %897 = vmatprep.subr.mxu0 0.0
      %898 = vmatpush1.msra.mxu0 0.0
      %899 = vmatprep.subr.mxu0 0.0
      %900 = vmatpush1.msra.mxu0 0.0
      %901 = vmatprep.subr.mxu0 0.0
      %902 = vmatpush1.msra.mxu0 0.0
      %903 = vmatprep.subr.mxu0 0.0
      %904 = vmatpush1.msra.mxu0 0.0
      %905 = vmatprep.subr.mxu0 0.0
      %906 = vmatpush1.msra.mxu0 0.0
      %907 = vmatprep.subr.mxu0 0.0
      %908 = vmatpush1.msra.mxu0 0.0
      %909 = vmatprep.subr.mxu0 0.0
      %910 = vmatpush1.msra.mxu0 0.0
      %911 = vmatprep.subr.mxu0 0.0
      %912 = vmatpush1.msra.mxu0 0.0
      %913 = vmatprep.subr.mxu0 0.0
      %914 = vmatpush1.msra.mxu0 0.0
      %915 = vmatprep.subr.mxu0 0.0
      %916 = vmatpush1.msra.mxu0 0.0
      %917 = vmatprep.subr.mxu0 0.0
      %918 = vmatpush1.msra.mxu0 0.0
      %919 = vmatprep.subr.mxu0 0.0
      %920 = vmatpush1.msra.mxu0 0.0
      %921 = vmatprep.subr.mxu0 0.0
      %922 = vmatpush1.msra.mxu0 0.0
      %923 = vmatprep.subr.mxu0 0.0
      %924 = vmatpush1.msra.mxu0 0.0
      %925 = vmatprep.subr.mxu0 0.0
      %926 = vmatpush1.msra.mxu0 0.0
      %927 = vmatprep.mubr.f32.mxu0 0.0
      %928 = vmatmul.mubr.f32.gmra.mrb[0].mxu0 %v816
      %v929 = vpop.f32.mrb[0].mxu0
      %v930 = vadd.f32 %v813, %v929
      %v931 = vpop.f32.mrb[0].mxu0
      %932 = vmatprep.mubr.f32.mxu0 0.0
      %933 = vmatmul.mubr.f32.gmra.mrb[0].mxu0 %v819
      %v934 = vpop.f32.mrb[0].mxu0
      %v935 = vadd.f32 %v813, %v934
      %v936 = vpop.f32.mrb[0].mxu0
      %937 = vmatprep.mubr.f32.mxu0 0.0
      %938 = vmatmul.mubr.f32.gmra.mrb[0].mxu0 %v822
      %v939 = vpop.f32.mrb[0].mxu0
      %v940 = vadd.f32 %v813, %v939
      %v941 = vpop.f32.mrb[0].mxu0
      %942 = vmatprep.mubr.f32.mxu0 0.0
      %943 = vmatmul.mubr.f32.gmra.mrb[0].mxu0 %v825
      %v944 = vpop.f32.mrb[0].mxu0
      %v945 = vadd.f32 %v813, %v944
      %v946 = vpop.f32.mrb[0].mxu0
      %947 = vmatprep.mubr.f32.mxu0 0.0
      %948 = vmatmul.mubr.f32.gmra.mrb[0].mxu0 %v828
      %v949 = vpop.f32.mrb[0].mxu0
      %v950 = vadd.f32 %v813, %v949
      %v951 = vpop.f32.mrb[0].mxu0
      %952 = vmatprep.mubr.f32.mxu0 0.0
      %953 = vmatmul.mubr.f32.gmra.mrb[0].mxu0 %v831
      %v954 = vpop.f32.mrb[0].mxu0
      %v955 = vadd.f32 %v813, %v954
      %v956 = vpop.f32.mrb[0].mxu0
      %957 = vmatprep.mubr.f32.mxu0 0.0
      %958 = vmatmul.mubr.f32.gmra.mrb[0].mxu0 %v834
      %v959 = vpop.f32.mrb[0].mxu0
      %v960 = vadd.f32 %v813, %v959
      %v961 = vpop.f32.mrb[0].mxu0
      %962 = vmatprep.mubr.f32.mxu0 0.0
      %963 = vmatmul.mubr.f32.gmra.mrb[0].mxu0 %v837
      %v964 = vpop.f32.mrb[0].mxu0
      %v965 = vadd.f32 %v813, %v964
      %v966 = vpop.f32.mrb[0].mxu0
      %967 = vmatprep.mubr.f32.mxu0 0.0
      %968 = vmatmul.mubr.f32.gmra.mrb[0].mxu0 %v840
      %v969 = vpop.f32.mrb[0].mxu0
      %v970 = vadd.f32 %v813, %v969
      %v971 = vpop.f32.mrb[0].mxu0
      %972 = vmatprep.mubr.f32.mxu0 0.0
      %973 = vmatmul.mubr.f32.gmra.mrb[0].mxu0 %v843
      %v974 = vpop.f32.mrb[0].mxu0
      %v975 = vadd.f32 %v813, %v974
      %v976 = vpop.f32.mrb[0].mxu0
      %977 = vmatprep.mubr.f32.mxu0 0.0
      %978 = vmatmul.mubr.f32.gmra.mrb[0].mxu0 %v846
      %v979 = vpop.f32.mrb[0].mxu0
      %v980 = vadd.f32 %v813, %v979
      %v981 = vpop.f32.mrb[0].mxu0
      %982 = vmatprep.mubr.f32.mxu0 0.0
      %983 = vmatmul.mubr.f32.gmra.mrb[0].mxu0 %v849
      %v984 = vpop.f32.mrb[0].mxu0
      %v985 = vadd.f32 %v813, %v984
      %v986 = vpop.f32.mrb[0].mxu0
      %987 = vmatprep.mubr.f32.mxu0 0.0
      %988 = vmatmul.mubr.f32.gmra.mrb[0].mxu0 %v852
      %v989 = vpop.f32.mrb[0].mxu0
      %v990 = vadd.f32 %v813, %v989
      %v991 = vpop.f32.mrb[0].mxu0
      %992 = vmatprep.mubr.f32.mxu0 0.0
      %993 = vmatmul.mubr.f32.gmra.mrb[0].mxu0 %v855
      %v994 = vpop.f32.mrb[0].mxu0
      %v995 = vadd.f32 %v813, %v994
      %v996 = vpop.f32.mrb[0].mxu0
      %997 = vmatprep.mubr.f32.mxu0 0.0
      %998 = vmatmul.mubr.f32.gmra.mrb[0].mxu0 %v858
      %v999 = vpop.f32.mrb[0].mxu0
      %v1000 = vadd.f32 %v813, %v999
      %v1001 = vpop.f32.mrb[0].mxu0
      %1002 = vmatprep.mubr.f32.mxu0 0.0
      %1003 = vmatmul.mubr.f32.gmra.mrb[0].mxu0 %v861
      %v1004 = vpop.f32.mrb[0].mxu0
      %v1005 = vadd.f32 %v813, %v1004
      %v1006 = vpop.f32.mrb[0].mxu0
      %1007 = vdwg.mxu0
      %1016 = vrot.lane.b32.xlu0 %v970, 64
      %v1017 = vpop.permute.xlu0 %1016
      %1018 = vrot.lane.b32.xlu0 %v975, 64
      %v1019 = vpop.permute.xlu0 %1018
      %1020 = vrot.lane.b32.xlu0 %v980, 64
      %v1021 = vpop.permute.xlu0 %1020
      %1022 = vrot.lane.b32.xlu0 %v985, 64
      %v1023 = vpop.permute.xlu0 %1022
      %1024 = vrot.lane.b32.xlu0 %v990, 64
      %v1025 = vpop.permute.xlu0 %1024
      %1026 = vrot.lane.b32.xlu0 %v995, 64
      %v1027 = vpop.permute.xlu0 %1026
      %1028 = vrot.lane.b32.xlu0 %v1000, 64
      %v1029 = vpop.permute.xlu0 %1028
      %1030 = vrot.lane.b32.xlu0 %v1005, 64
      %v1031 = vpop.permute.xlu0 %1030
      %v1040 = vsel %vm346, %v930, %v1017
      %v1041 = vsel %vm346, %v935, %v1019
      %v1042 = vsel %vm346, %v940, %v1021
      %v1043 = vsel %vm346, %v945, %v1023
      %v1044 = vsel %vm346, %v950, %v1025
      %v1045 = vsel %vm346, %v955, %v1027
      %v1046 = vsel %vm346, %v960, %v1029
      %v1047 = vsel %vm346, %v965, %v1031
      %1048 = vst [vmem:[%s328] sm:$0xff] %v1040
      %1049 = vst [vmem:[%s328 + $0x8] sm:$0xff] %v1041
      %1050 = vst [vmem:[%s328 + $0x10] sm:$0xff] %v1042
      %1051 = vst [vmem:[%s328 + $0x18] sm:$0xff] %v1043
      %1052 = vst [vmem:[%s328 + $0x20] sm:$0xff] %v1044
      %1053 = vst [vmem:[%s328 + $0x28] sm:$0xff] %v1045
      %1054 = vst [vmem:[%s328 + $0x30] sm:$0xff] %v1046
      %1055 = vst [vmem:[%s328 + $0x38] sm:$0xff] %v1047
      %vm1056 = vcmask 517121
      %v1057 = vsel %vm1056, %v645, 0.0
      %1058 = vadd.xlane.f32.xlu0 %v1057
      %v1059 = vpop.xlane.xlu0 %1058
      %v1060 = vmul.f32 %v1059, %v612
      %v1061 = vsub.f32 %v645, %v1060
      %v1062 = vlaneseq
      %v1063 = vshrl.u32 %v1062, 7
      %v1064 = vsub.s32 1, %v1063
      %v1065 = vrot.slane %v1061, %v1064
      %v1066 = vsub.f32 %v629, %v1065
      %v1067 = vsub.f32 %v630, %v1065
      %v1068 = vsub.f32 %v631, %v1065
      %v1069 = vsub.f32 %v632, %v1065
      %v1070 = vsub.f32 %v633, %v1065
      %v1071 = vsub.f32 %v634, %v1065
      %v1072 = vsub.f32 %v635, %v1065
      %v1073 = vsub.f32 %v636, %v1065
      %v1074 = vsub.f32 %v637, %v1065
      %v1075 = vsub.f32 %v638, %v1065
      %v1076 = vsub.f32 %v639, %v1065
      %v1077 = vsub.f32 %v640, %v1065
      %v1078 = vsub.f32 %v641, %v1065
      %v1079 = vsub.f32 %v642, %v1065
      %v1080 = vsub.f32 %v643, %v1065
      %v1081 = vsub.f32 %v644, %v1065
      %v1082 = vmul.f32 %v1066, %v1066
      %v1083 = vmul.f32 %v1067, %v1067
      %v1084 = vmul.f32 %v1068, %v1068
      %v1085 = vmul.f32 %v1069, %v1069
      %v1086 = vmul.f32 %v1070, %v1070
      %v1087 = vmul.f32 %v1071, %v1071
      %v1088 = vmul.f32 %v1072, %v1072
      %v1089 = vmul.f32 %v1073, %v1073
      %v1090 = vmul.f32 %v1074, %v1074
      %v1091 = vmul.f32 %v1075, %v1075
      %v1092 = vmul.f32 %v1076, %v1076
      %v1093 = vmul.f32 %v1077, %v1077
      %v1094 = vmul.f32 %v1078, %v1078
      %v1095 = vmul.f32 %v1079, %v1079
      %v1096 = vmul.f32 %v1080, %v1080
      %v1097 = vmul.f32 %v1081, %v1081
      %v1098 = vsel %vm346, %v1082, 0.0
      %1099 = vadd.xlane.f32.xlu0 %v1098
      %v1100 = vpop.xlane.xlu0 %1099
      %v1101 = vsel %vm346, %v1083, 0.0
      %1102 = vadd.xlane.f32.xlu0 %v1101
      %v1103 = vpop.xlane.xlu0 %1102
      %v1104 = vsel %vm346, %v1084, 0.0
      %1105 = vadd.xlane.f32.xlu0 %v1104
      %v1106 = vpop.xlane.xlu0 %1105
      %v1107 = vsel %vm346, %v1085, 0.0
      %1108 = vadd.xlane.f32.xlu0 %v1107
      %v1109 = vpop.xlane.xlu0 %1108
      %v1110 = vsel %vm346, %v1086, 0.0
      %1111 = vadd.xlane.f32.xlu0 %v1110
      %v1112 = vpop.xlane.xlu0 %1111
      %v1113 = vsel %vm346, %v1087, 0.0
      %1114 = vadd.xlane.f32.xlu0 %v1113
      %v1115 = vpop.xlane.xlu0 %1114
      %v1116 = vsel %vm346, %v1088, 0.0
      %1117 = vadd.xlane.f32.xlu0 %v1116
      %v1118 = vpop.xlane.xlu0 %1117
      %v1119 = vsel %vm346, %v1089, 0.0
      %1120 = vadd.xlane.f32.xlu0 %v1119
      %v1121 = vpop.xlane.xlu0 %1120
      %v1122 = vsel %vm346, %v1090, 0.0
      %1123 = vadd.xlane.f32.xlu0 %v1122
      %v1124 = vpop.xlane.xlu0 %1123
      %v1125 = vsel %vm346, %v1091, 0.0
      %1126 = vadd.xlane.f32.xlu0 %v1125
      %v1127 = vpop.xlane.xlu0 %1126
      %v1128 = vsel %vm346, %v1092, 0.0
      %1129 = vadd.xlane.f32.xlu0 %v1128
      %v1130 = vpop.xlane.xlu0 %1129
      %v1131 = vsel %vm346, %v1093, 0.0
      %1132 = vadd.xlane.f32.xlu0 %v1131
      %v1133 = vpop.xlane.xlu0 %1132
      %v1134 = vsel %vm346, %v1094, 0.0
      %1135 = vadd.xlane.f32.xlu0 %v1134
      %v1136 = vpop.xlane.xlu0 %1135
      %v1137 = vsel %vm346, %v1095, 0.0
      %1138 = vadd.xlane.f32.xlu0 %v1137
      %v1139 = vpop.xlane.xlu0 %1138
      %v1140 = vsel %vm346, %v1096, 0.0
      %1141 = vadd.xlane.f32.xlu0 %v1140
      %v1142 = vpop.xlane.xlu0 %1141
      %v1143 = vsel %vm346, %v1097, 0.0
      %1144 = vadd.xlane.f32.xlu0 %v1143
      %v1145 = vpop.xlane.xlu0 %1144
      %v1146 = vmul.f32 %v1100, %v612
      %v1147 = vmul.f32 %v1103, %v612
      %v1148 = vmul.f32 %v1106, %v612
      %v1149 = vmul.f32 %v1109, %v612
      %v1150 = vmul.f32 %v1112, %v612
      %v1151 = vmul.f32 %v1115, %v612
      %v1152 = vmul.f32 %v1118, %v612
      %v1153 = vmul.f32 %v1121, %v612
      %v1154 = vmul.f32 %v1124, %v612
      %v1155 = vmul.f32 %v1127, %v612
      %v1156 = vmul.f32 %v1130, %v612
      %v1157 = vmul.f32 %v1133, %v612
      %v1158 = vmul.f32 %v1136, %v612
      %v1159 = vmul.f32 %v1139, %v612
      %v1160 = vmul.f32 %v1142, %v612
      %v1161 = vmul.f32 %v1145, %v612
      %v1162 = vadd.f32 %v1146, 1e-05
      %v1163 = vadd.f32 %v1147, 1e-05
      %v1164 = vadd.f32 %v1148, 1e-05
      %v1165 = vadd.f32 %v1149, 1e-05
      %v1166 = vadd.f32 %v1150, 1e-05
      %v1167 = vadd.f32 %v1151, 1e-05
      %v1168 = vadd.f32 %v1152, 1e-05
      %v1169 = vadd.f32 %v1153, 1e-05
      %v1170 = vadd.f32 %v1154, 1e-05
      %v1171 = vadd.f32 %v1155, 1e-05
      %v1172 = vadd.f32 %v1156, 1e-05
      %v1173 = vadd.f32 %v1157, 1e-05
      %v1174 = vadd.f32 %v1158, 1e-05
      %v1175 = vadd.f32 %v1159, 1e-05
      %v1176 = vadd.f32 %v1160, 1e-05
      %v1177 = vadd.f32 %v1161, 1e-05
      %v1178 = vrsqrt.pop %v1162
      %v1179 = vrsqrt.pop %v1163
      %v1180 = vrsqrt.pop %v1164
      %v1181 = vrsqrt.pop %v1165
      %v1182 = vrsqrt.pop %v1166
      %v1183 = vrsqrt.pop %v1167
      %v1184 = vrsqrt.pop %v1168
      %v1185 = vrsqrt.pop %v1169
      %v1186 = vrsqrt.pop %v1170
      %v1187 = vrsqrt.pop %v1171
      %v1188 = vrsqrt.pop %v1172
      %v1189 = vrsqrt.pop %v1173
      %v1190 = vrsqrt.pop %v1174
      %v1191 = vrsqrt.pop %v1175
      %v1192 = vrsqrt.pop %v1176
      %v1193 = vrsqrt.pop %v1177
      %v1194 = vmul.f32 %v1066, %v1178
      %v1195 = vmul.f32 %v1067, %v1179
      %v1196 = vmul.f32 %v1068, %v1180
      %v1197 = vmul.f32 %v1069, %v1181
      %v1198 = vmul.f32 %v1070, %v1182
      %v1199 = vmul.f32 %v1071, %v1183
      %v1200 = vmul.f32 %v1072, %v1184
      %v1201 = vmul.f32 %v1073, %v1185
      %v1202 = vmul.f32 %v1074, %v1186
      %v1203 = vmul.f32 %v1075, %v1187
      %v1204 = vmul.f32 %v1076, %v1188
      %v1205 = vmul.f32 %v1077, %v1189
      %v1206 = vmul.f32 %v1078, %v1190
      %v1207 = vmul.f32 %v1079, %v1191
      %v1208 = vmul.f32 %v1080, %v1192
      %v1209 = vmul.f32 %v1081, %v1193
      %v1211 = vsel %vm346, %v1194, 0
      %v1214 = vsel %vm346, %v1195, 0
      %v1217 = vsel %vm346, %v1196, 0
      %v1220 = vsel %vm346, %v1197, 0
      %v1223 = vsel %vm346, %v1198, 0
      %v1226 = vsel %vm346, %v1199, 0
      %v1229 = vsel %vm346, %v1200, 0
      %v1232 = vsel %vm346, %v1201, 0
      %v1235 = vsel %vm346, %v1202, 0
      %v1238 = vsel %vm346, %v1203, 0
      %v1241 = vsel %vm346, %v1204, 0
      %v1244 = vsel %vm346, %v1205, 0
      %v1247 = vsel %vm346, %v1206, 0
      %v1250 = vsel %vm346, %v1207, 0
      %v1253 = vsel %vm346, %v1208, 0
      %v1256 = vsel %vm346, %v1209, 0
      %1258 = vmatprep.subr.mxu0 0.0
      %1259 = vmatpush1.msra.mxu0 %v646
      %1260 = vmatprep.subr.mxu0 0.0
      %1261 = vmatpush1.msra.mxu0 %v647
      %1262 = vmatprep.subr.mxu0 0.0
      %1263 = vmatpush1.msra.mxu0 %v648
      %1264 = vmatprep.subr.mxu0 0.0
      %1265 = vmatpush1.msra.mxu0 %v649
      %1266 = vmatprep.subr.mxu0 0.0
      %1267 = vmatpush1.msra.mxu0 %v650
      %1268 = vmatprep.subr.mxu0 0.0
      %1269 = vmatpush1.msra.mxu0 %v651
      %1270 = vmatprep.subr.mxu0 0.0
      %1271 = vmatpush1.msra.mxu0 %v652
      %1272 = vmatprep.subr.mxu0 0.0
      %1273 = vmatpush1.msra.mxu0 %v653
      %1274 = vmatprep.subr.mxu0 0.0
      %1275 = vmatpush1.msra.mxu0 0.0
      %1276 = vmatprep.subr.mxu0 0.0
      %1277 = vmatpush1.msra.mxu0 0.0
      %1278 = vmatprep.subr.mxu0 0.0
      %1279 = vmatpush1.msra.mxu0 0.0
      %1280 = vmatprep.subr.mxu0 0.0
      %1281 = vmatpush1.msra.mxu0 0.0
      %1282 = vmatprep.subr.mxu0 0.0
      %1283 = vmatpush1.msra.mxu0 0.0
      %1284 = vmatprep.subr.mxu0 0.0
      %1285 = vmatpush1.msra.mxu0 0.0
      %1286 = vmatprep.subr.mxu0 0.0
      %1287 = vmatpush1.msra.mxu0 0.0
      %1288 = vmatprep.subr.mxu0 0.0
      %1289 = vmatpush1.msra.mxu0 0.0
      %1290 = vmatprep.subr.mxu0 0.0
      %1291 = vmatpush1.msra.mxu0 0.0
      %1292 = vmatprep.subr.mxu0 0.0
      %1293 = vmatpush1.msra.mxu0 0.0
      %1294 = vmatprep.subr.mxu0 0.0
      %1295 = vmatpush1.msra.mxu0 0.0
      %1296 = vmatprep.subr.mxu0 0.0
      %1297 = vmatpush1.msra.mxu0 0.0
      %1298 = vmatprep.subr.mxu0 0.0
      %1299 = vmatpush1.msra.mxu0 0.0
      %1300 = vmatprep.subr.mxu0 0.0
      %1301 = vmatpush1.msra.mxu0 0.0
      %1302 = vmatprep.subr.mxu0 0.0
      %1303 = vmatpush1.msra.mxu0 0.0
      %1304 = vmatprep.subr.mxu0 0.0
      %1305 = vmatpush1.msra.mxu0 0.0
      %1306 = vmatprep.subr.mxu0 0.0
      %1307 = vmatpush1.msra.mxu0 0.0
      %1308 = vmatprep.subr.mxu0 0.0
      %1309 = vmatpush1.msra.mxu0 0.0
      %1310 = vmatprep.subr.mxu0 0.0
      %1311 = vmatpush1.msra.mxu0 0.0
      %1312 = vmatprep.subr.mxu0 0.0
      %1313 = vmatpush1.msra.mxu0 0.0
      %1314 = vmatprep.subr.mxu0 0.0
      %1315 = vmatpush1.msra.mxu0 0.0
      %1316 = vmatprep.subr.mxu0 0.0
      %1317 = vmatpush1.msra.mxu0 0.0
      %1318 = vmatprep.subr.mxu0 0.0
      %1319 = vmatpush1.msra.mxu0 0.0
      %1320 = vmatprep.subr.mxu0 0.0
      %1321 = vmatpush1.msra.mxu0 0.0
      %1322 = vmatprep.mubr.f32.mxu0 0.0
      %1323 = vmatmul.mubr.f32.gmra.mrb[0].mxu0 %v1211
      %v1324 = vpop.f32.mrb[0].mxu0
      %v1325 = vadd.f32 %v813, %v1324
      %v1326 = vpop.f32.mrb[0].mxu0
      %1327 = vmatprep.mubr.f32.mxu0 0.0
      %1328 = vmatmul.mubr.f32.gmra.mrb[0].mxu0 %v1214
      %v1329 = vpop.f32.mrb[0].mxu0
      %v1330 = vadd.f32 %v813, %v1329
      %v1331 = vpop.f32.mrb[0].mxu0
      %1332 = vmatprep.mubr.f32.mxu0 0.0
      %1333 = vmatmul.mubr.f32.gmra.mrb[0].mxu0 %v1217
      %v1334 = vpop.f32.mrb[0].mxu0
      %v1335 = vadd.f32 %v813, %v1334
      %v1336 = vpop.f32.mrb[0].mxu0
      %1337 = vmatprep.mubr.f32.mxu0 0.0
      %1338 = vmatmul.mubr.f32.gmra.mrb[0].mxu0 %v1220
      %v1339 = vpop.f32.mrb[0].mxu0
      %v1340 = vadd.f32 %v813, %v1339
      %v1341 = vpop.f32.mrb[0].mxu0
      %1342 = vmatprep.mubr.f32.mxu0 0.0
      %1343 = vmatmul.mubr.f32.gmra.mrb[0].mxu0 %v1223
      %v1344 = vpop.f32.mrb[0].mxu0
      %v1345 = vadd.f32 %v813, %v1344
      %v1346 = vpop.f32.mrb[0].mxu0
      %1347 = vmatprep.mubr.f32.mxu0 0.0
      %1348 = vmatmul.mubr.f32.gmra.mrb[0].mxu0 %v1226
      %v1349 = vpop.f32.mrb[0].mxu0
      %v1350 = vadd.f32 %v813, %v1349
      %v1351 = vpop.f32.mrb[0].mxu0
      %1352 = vmatprep.mubr.f32.mxu0 0.0
      %1353 = vmatmul.mubr.f32.gmra.mrb[0].mxu0 %v1229
      %v1354 = vpop.f32.mrb[0].mxu0
      %v1355 = vadd.f32 %v813, %v1354
      %v1356 = vpop.f32.mrb[0].mxu0
      %1357 = vmatprep.mubr.f32.mxu0 0.0
      %1358 = vmatmul.mubr.f32.gmra.mrb[0].mxu0 %v1232
      %v1359 = vpop.f32.mrb[0].mxu0
      %v1360 = vadd.f32 %v813, %v1359
      %v1361 = vpop.f32.mrb[0].mxu0
      %1362 = vmatprep.mubr.f32.mxu0 0.0
      %1363 = vmatmul.mubr.f32.gmra.mrb[0].mxu0 %v1235
      %v1364 = vpop.f32.mrb[0].mxu0
      %v1365 = vadd.f32 %v813, %v1364
      %v1366 = vpop.f32.mrb[0].mxu0
      %1367 = vmatprep.mubr.f32.mxu0 0.0
      %1368 = vmatmul.mubr.f32.gmra.mrb[0].mxu0 %v1238
      %v1369 = vpop.f32.mrb[0].mxu0
      %v1370 = vadd.f32 %v813, %v1369
      %v1371 = vpop.f32.mrb[0].mxu0
      %1372 = vmatprep.mubr.f32.mxu0 0.0
      %1373 = vmatmul.mubr.f32.gmra.mrb[0].mxu0 %v1241
      %v1374 = vpop.f32.mrb[0].mxu0
      %v1375 = vadd.f32 %v813, %v1374
      %v1376 = vpop.f32.mrb[0].mxu0
      %1377 = vmatprep.mubr.f32.mxu0 0.0
      %1378 = vmatmul.mubr.f32.gmra.mrb[0].mxu0 %v1244
      %v1379 = vpop.f32.mrb[0].mxu0
      %v1380 = vadd.f32 %v813, %v1379
      %v1381 = vpop.f32.mrb[0].mxu0
      %1382 = vmatprep.mubr.f32.mxu0 0.0
      %1383 = vmatmul.mubr.f32.gmra.mrb[0].mxu0 %v1247
      %v1384 = vpop.f32.mrb[0].mxu0
      %v1385 = vadd.f32 %v813, %v1384
      %v1386 = vpop.f32.mrb[0].mxu0
      %1387 = vmatprep.mubr.f32.mxu0 0.0
      %1388 = vmatmul.mubr.f32.gmra.mrb[0].mxu0 %v1250
      %v1389 = vpop.f32.mrb[0].mxu0
      %v1390 = vadd.f32 %v813, %v1389
      %v1391 = vpop.f32.mrb[0].mxu0
      %1392 = vmatprep.mubr.f32.mxu0 0.0
      %1393 = vmatmul.mubr.f32.gmra.mrb[0].mxu0 %v1253
      %v1394 = vpop.f32.mrb[0].mxu0
      %v1395 = vadd.f32 %v813, %v1394
      %v1396 = vpop.f32.mrb[0].mxu0
      %1397 = vmatprep.mubr.f32.mxu0 0.0
      %1398 = vmatmul.mubr.f32.gmra.mrb[0].mxu0 %v1256
      %v1399 = vpop.f32.mrb[0].mxu0
      %v1400 = vadd.f32 %v813, %v1399
      %v1401 = vpop.f32.mrb[0].mxu0
      %1402 = vdwg.mxu0
      %1411 = vrot.lane.b32.xlu0 %v1365, 64
      %v1412 = vpop.permute.xlu0 %1411
      %1413 = vrot.lane.b32.xlu0 %v1370, 64
      %v1414 = vpop.permute.xlu0 %1413
      %1415 = vrot.lane.b32.xlu0 %v1375, 64
      %v1416 = vpop.permute.xlu0 %1415
      %1417 = vrot.lane.b32.xlu0 %v1380, 64
      %v1418 = vpop.permute.xlu0 %1417
      %1419 = vrot.lane.b32.xlu0 %v1385, 64
      %v1420 = vpop.permute.xlu0 %1419
      %1421 = vrot.lane.b32.xlu0 %v1390, 64
      %v1422 = vpop.permute.xlu0 %1421
      %1423 = vrot.lane.b32.xlu0 %v1395, 64
      %v1424 = vpop.permute.xlu0 %1423
      %1425 = vrot.lane.b32.xlu0 %v1400, 64
      %v1426 = vpop.permute.xlu0 %1425
      %v1435 = vsel %vm346, %v1325, %v1412
      %v1436 = vsel %vm346, %v1330, %v1414
      %v1437 = vsel %vm346, %v1335, %v1416
      %v1438 = vsel %vm346, %v1340, %v1418
      %v1439 = vsel %vm346, %v1345, %v1420
      %v1440 = vsel %vm346, %v1350, %v1422
      %v1441 = vsel %vm346, %v1355, %v1424
      %v1442 = vsel %vm346, %v1360, %v1426
      %s1443 = scalar_lea.vmem %s328, 64
      %1444 = vst [vmem:[%s1443] sm:$0xff] %v1435
      %1445 = vst [vmem:[%s1443 + $0x8] sm:$0xff] %v1436
      %1446 = vst [vmem:[%s1443 + $0x10] sm:$0xff] %v1437
      %1447 = vst [vmem:[%s1443 + $0x18] sm:$0xff] %v1438
      %1448 = vst [vmem:[%s1443 + $0x20] sm:$0xff] %v1439
      %1449 = vst [vmem:[%s1443 + $0x28] sm:$0xff] %v1440
      %1450 = vst [vmem:[%s1443 + $0x30] sm:$0xff] %v1441
      %1451 = vst [vmem:[%s1443 + $0x38] sm:$0xff] %v1442
      %vm1452 = vcmask 518146
      %v1453 = vsel %vm1452, %v645, 0.0
      %1454 = vadd.xlane.f32.xlu0 %v1453
      %v1455 = vpop.xlane.xlu0 %1454
      %v1456 = vmul.f32 %v1455, %v612
      %v1457 = vsub.f32 %v645, %v1456
      %v1458 = vlaneseq
      %v1459 = vshrl.u32 %v1458, 7
      %v1460 = vsub.s32 2, %v1459
      %v1461 = vrot.slane %v1457, %v1460
      %v1462 = vsub.f32 %v629, %v1461
      %v1463 = vsub.f32 %v630, %v1461
      %v1464 = vsub.f32 %v631, %v1461
      %v1465 = vsub.f32 %v632, %v1461
      %v1466 = vsub.f32 %v633, %v1461
      %v1467 = vsub.f32 %v634, %v1461
      %v1468 = vsub.f32 %v635, %v1461
      %v1469 = vsub.f32 %v636, %v1461
      %v1470 = vsub.f32 %v637, %v1461
      %v1471 = vsub.f32 %v638, %v1461
      %v1472 = vsub.f32 %v639, %v1461
      %v1473 = vsub.f32 %v640, %v1461
      %v1474 = vsub.f32 %v641, %v1461
      %v1475 = vsub.f32 %v642, %v1461
      %v1476 = vsub.f32 %v643, %v1461
      %v1477 = vsub.f32 %v644, %v1461
      %v1478 = vmul.f32 %v1462, %v1462
      %v1479 = vmul.f32 %v1463, %v1463
      %v1480 = vmul.f32 %v1464, %v1464
      %v1481 = vmul.f32 %v1465, %v1465
      %v1482 = vmul.f32 %v1466, %v1466
      %v1483 = vmul.f32 %v1467, %v1467
      %v1484 = vmul.f32 %v1468, %v1468
      %v1485 = vmul.f32 %v1469, %v1469
      %v1486 = vmul.f32 %v1470, %v1470
      %v1487 = vmul.f32 %v1471, %v1471
      %v1488 = vmul.f32 %v1472, %v1472
      %v1489 = vmul.f32 %v1473, %v1473
      %v1490 = vmul.f32 %v1474, %v1474
      %v1491 = vmul.f32 %v1475, %v1475
      %v1492 = vmul.f32 %v1476, %v1476
      %v1493 = vmul.f32 %v1477, %v1477
      %v1494 = vsel %vm346, %v1478, 0.0
      %1495 = vadd.xlane.f32.xlu0 %v1494
      %v1496 = vpop.xlane.xlu0 %1495
      %v1497 = vsel %vm346, %v1479, 0.0
      %1498 = vadd.xlane.f32.xlu0 %v1497
      %v1499 = vpop.xlane.xlu0 %1498
      %v1500 = vsel %vm346, %v1480, 0.0
      %1501 = vadd.xlane.f32.xlu0 %v1500
      %v1502 = vpop.xlane.xlu0 %1501
      %v1503 = vsel %vm346, %v1481, 0.0
      %1504 = vadd.xlane.f32.xlu0 %v1503
      %v1505 = vpop.xlane.xlu0 %1504
      %v1506 = vsel %vm346, %v1482, 0.0
      %1507 = vadd.xlane.f32.xlu0 %v1506
      %v1508 = vpop.xlane.xlu0 %1507
      %v1509 = vsel %vm346, %v1483, 0.0
      %1510 = vadd.xlane.f32.xlu0 %v1509
      %v1511 = vpop.xlane.xlu0 %1510
      %v1512 = vsel %vm346, %v1484, 0.0
      %1513 = vadd.xlane.f32.xlu0 %v1512
      %v1514 = vpop.xlane.xlu0 %1513
      %v1515 = vsel %vm346, %v1485, 0.0
      %1516 = vadd.xlane.f32.xlu0 %v1515
      %v1517 = vpop.xlane.xlu0 %1516
      %v1518 = vsel %vm346, %v1486, 0.0
      %1519 = vadd.xlane.f32.xlu0 %v1518
      %v1520 = vpop.xlane.xlu0 %1519
      %v1521 = vsel %vm346, %v1487, 0.0
      %1522 = vadd.xlane.f32.xlu0 %v1521
      %v1523 = vpop.xlane.xlu0 %1522
      %v1524 = vsel %vm346, %v1488, 0.0
      %1525 = vadd.xlane.f32.xlu0 %v1524
      %v1526 = vpop.xlane.xlu0 %1525
      %v1527 = vsel %vm346, %v1489, 0.0
      %1528 = vadd.xlane.f32.xlu0 %v1527
      %v1529 = vpop.xlane.xlu0 %1528
      %v1530 = vsel %vm346, %v1490, 0.0
      %1531 = vadd.xlane.f32.xlu0 %v1530
      %v1532 = vpop.xlane.xlu0 %1531
      %v1533 = vsel %vm346, %v1491, 0.0
      %1534 = vadd.xlane.f32.xlu0 %v1533
      %v1535 = vpop.xlane.xlu0 %1534
      %v1536 = vsel %vm346, %v1492, 0.0
      %1537 = vadd.xlane.f32.xlu0 %v1536
      %v1538 = vpop.xlane.xlu0 %1537
      %v1539 = vsel %vm346, %v1493, 0.0
      %1540 = vadd.xlane.f32.xlu0 %v1539
      %v1541 = vpop.xlane.xlu0 %1540
      %v1542 = vmul.f32 %v1496, %v612
      %v1543 = vmul.f32 %v1499, %v612
      %v1544 = vmul.f32 %v1502, %v612
      %v1545 = vmul.f32 %v1505, %v612
      %v1546 = vmul.f32 %v1508, %v612
      %v1547 = vmul.f32 %v1511, %v612
      %v1548 = vmul.f32 %v1514, %v612
      %v1549 = vmul.f32 %v1517, %v612
      %v1550 = vmul.f32 %v1520, %v612
      %v1551 = vmul.f32 %v1523, %v612
      %v1552 = vmul.f32 %v1526, %v612
      %v1553 = vmul.f32 %v1529, %v612
      %v1554 = vmul.f32 %v1532, %v612
      %v1555 = vmul.f32 %v1535, %v612
      %v1556 = vmul.f32 %v1538, %v612
      %v1557 = vmul.f32 %v1541, %v612
      %v1558 = vadd.f32 %v1542, 1e-05
      %v1559 = vadd.f32 %v1543, 1e-05
      %v1560 = vadd.f32 %v1544, 1e-05
      %v1561 = vadd.f32 %v1545, 1e-05
      %v1562 = vadd.f32 %v1546, 1e-05
      %v1563 = vadd.f32 %v1547, 1e-05
      %v1564 = vadd.f32 %v1548, 1e-05
      %v1565 = vadd.f32 %v1549, 1e-05
      %v1566 = vadd.f32 %v1550, 1e-05
      %v1567 = vadd.f32 %v1551, 1e-05
      %v1568 = vadd.f32 %v1552, 1e-05
      %v1569 = vadd.f32 %v1553, 1e-05
      %v1570 = vadd.f32 %v1554, 1e-05
      %v1571 = vadd.f32 %v1555, 1e-05
      %v1572 = vadd.f32 %v1556, 1e-05
      %v1573 = vadd.f32 %v1557, 1e-05
      %v1574 = vrsqrt.pop %v1558
      %v1575 = vrsqrt.pop %v1559
      %v1576 = vrsqrt.pop %v1560
      %v1577 = vrsqrt.pop %v1561
      %v1578 = vrsqrt.pop %v1562
      %v1579 = vrsqrt.pop %v1563
      %v1580 = vrsqrt.pop %v1564
      %v1581 = vrsqrt.pop %v1565
      %v1582 = vrsqrt.pop %v1566
      %v1583 = vrsqrt.pop %v1567
      %v1584 = vrsqrt.pop %v1568
      %v1585 = vrsqrt.pop %v1569
      %v1586 = vrsqrt.pop %v1570
      %v1587 = vrsqrt.pop %v1571
      %v1588 = vrsqrt.pop %v1572
      %v1589 = vrsqrt.pop %v1573
      %v1590 = vmul.f32 %v1462, %v1574
      %v1591 = vmul.f32 %v1463, %v1575
      %v1592 = vmul.f32 %v1464, %v1576
      %v1593 = vmul.f32 %v1465, %v1577
      %v1594 = vmul.f32 %v1466, %v1578
      %v1595 = vmul.f32 %v1467, %v1579
      %v1596 = vmul.f32 %v1468, %v1580
      %v1597 = vmul.f32 %v1469, %v1581
      %v1598 = vmul.f32 %v1470, %v1582
      %v1599 = vmul.f32 %v1471, %v1583
      %v1600 = vmul.f32 %v1472, %v1584
      %v1601 = vmul.f32 %v1473, %v1585
      %v1602 = vmul.f32 %v1474, %v1586
      %v1603 = vmul.f32 %v1475, %v1587
      %v1604 = vmul.f32 %v1476, %v1588
      %v1605 = vmul.f32 %v1477, %v1589
      %v1607 = vsel %vm346, %v1590, 0
      %v1610 = vsel %vm346, %v1591, 0
      %v1613 = vsel %vm346, %v1592, 0
      %v1616 = vsel %vm346, %v1593, 0
      %v1619 = vsel %vm346, %v1594, 0
      %v1622 = vsel %vm346, %v1595, 0
      %v1625 = vsel %vm346, %v1596, 0
      %v1628 = vsel %vm346, %v1597, 0
      %v1631 = vsel %vm346, %v1598, 0
      %v1634 = vsel %vm346, %v1599, 0
      %v1637 = vsel %vm346, %v1600, 0
      %v1640 = vsel %vm346, %v1601, 0
      %v1643 = vsel %vm346, %v1602, 0
      %v1646 = vsel %vm346, %v1603, 0
      %v1649 = vsel %vm346, %v1604, 0
      %v1652 = vsel %vm346, %v1605, 0
      %1654 = vmatprep.subr.mxu0 0.0
      %1655 = vmatpush1.msra.mxu0 %v646
      %1656 = vmatprep.subr.mxu0 0.0
      %1657 = vmatpush1.msra.mxu0 %v647
      %1658 = vmatprep.subr.mxu0 0.0
      %1659 = vmatpush1.msra.mxu0 %v648
      %1660 = vmatprep.subr.mxu0 0.0
      %1661 = vmatpush1.msra.mxu0 %v649
      %1662 = vmatprep.subr.mxu0 0.0
      %1663 = vmatpush1.msra.mxu0 %v650
      %1664 = vmatprep.subr.mxu0 0.0
      %1665 = vmatpush1.msra.mxu0 %v651
      %1666 = vmatprep.subr.mxu0 0.0
      %1667 = vmatpush1.msra.mxu0 %v652
      %1668 = vmatprep.subr.mxu0 0.0
      %1669 = vmatpush1.msra.mxu0 %v653
      %1670 = vmatprep.subr.mxu0 0.0
      %1671 = vmatpush1.msra.mxu0 0.0
      %1672 = vmatprep.subr.mxu0 0.0
      %1673 = vmatpush1.msra.mxu0 0.0
      %1674 = vmatprep.subr.mxu0 0.0
      %1675 = vmatpush1.msra.mxu0 0.0
      %1676 = vmatprep.subr.mxu0 0.0
      %1677 = vmatpush1.msra.mxu0 0.0
      %1678 = vmatprep.subr.mxu0 0.0
      %1679 = vmatpush1.msra.mxu0 0.0
      %1680 = vmatprep.subr.mxu0 0.0
      %1681 = vmatpush1.msra.mxu0 0.0
      %1682 = vmatprep.subr.mxu0 0.0
      %1683 = vmatpush1.msra.mxu0 0.0
      %1684 = vmatprep.subr.mxu0 0.0
      %1685 = vmatpush1.msra.mxu0 0.0
      %1686 = vmatprep.subr.mxu0 0.0
      %1687 = vmatpush1.msra.mxu0 0.0
      %1688 = vmatprep.subr.mxu0 0.0
      %1689 = vmatpush1.msra.mxu0 0.0
      %1690 = vmatprep.subr.mxu0 0.0
      %1691 = vmatpush1.msra.mxu0 0.0
      %1692 = vmatprep.subr.mxu0 0.0
      %1693 = vmatpush1.msra.mxu0 0.0
      %1694 = vmatprep.subr.mxu0 0.0
      %1695 = vmatpush1.msra.mxu0 0.0
      %1696 = vmatprep.subr.mxu0 0.0
      %1697 = vmatpush1.msra.mxu0 0.0
      %1698 = vmatprep.subr.mxu0 0.0
      %1699 = vmatpush1.msra.mxu0 0.0
      %1700 = vmatprep.subr.mxu0 0.0
      %1701 = vmatpush1.msra.mxu0 0.0
      %1702 = vmatprep.subr.mxu0 0.0
      %1703 = vmatpush1.msra.mxu0 0.0
      %1704 = vmatprep.subr.mxu0 0.0
      %1705 = vmatpush1.msra.mxu0 0.0
      %1706 = vmatprep.subr.mxu0 0.0
      %1707 = vmatpush1.msra.mxu0 0.0
      %1708 = vmatprep.subr.mxu0 0.0
      %1709 = vmatpush1.msra.mxu0 0.0
      %1710 = vmatprep.subr.mxu0 0.0
      %1711 = vmatpush1.msra.mxu0 0.0
      %1712 = vmatprep.subr.mxu0 0.0
      %1713 = vmatpush1.msra.mxu0 0.0
      %1714 = vmatprep.subr.mxu0 0.0
      %1715 = vmatpush1.msra.mxu0 0.0
      %1716 = vmatprep.subr.mxu0 0.0
      %1717 = vmatpush1.msra.mxu0 0.0
      %1718 = vmatprep.mubr.f32.mxu0 0.0
      %1719 = vmatmul.mubr.f32.gmra.mrb[0].mxu0 %v1607
      %v1720 = vpop.f32.mrb[0].mxu0
      %v1721 = vadd.f32 %v813, %v1720
      %v1722 = vpop.f32.mrb[0].mxu0
      %1723 = vmatprep.mubr.f32.mxu0 0.0
      %1724 = vmatmul.mubr.f32.gmra.mrb[0].mxu0 %v1610
      %v1725 = vpop.f32.mrb[0].mxu0
      %v1726 = vadd.f32 %v813, %v1725
      %v1727 = vpop.f32.mrb[0].mxu0
      %1728 = vmatprep.mubr.f32.mxu0 0.0
      %1729 = vmatmul.mubr.f32.gmra.mrb[0].mxu0 %v1613
      %v1730 = vpop.f32.mrb[0].mxu0
      %v1731 = vadd.f32 %v813, %v1730
      %v1732 = vpop.f32.mrb[0].mxu0
      %1733 = vmatprep.mubr.f32.mxu0 0.0
      %1734 = vmatmul.mubr.f32.gmra.mrb[0].mxu0 %v1616
      %v1735 = vpop.f32.mrb[0].mxu0
      %v1736 = vadd.f32 %v813, %v1735
      %v1737 = vpop.f32.mrb[0].mxu0
      %1738 = vmatprep.mubr.f32.mxu0 0.0
      %1739 = vmatmul.mubr.f32.gmra.mrb[0].mxu0 %v1619
      %v1740 = vpop.f32.mrb[0].mxu0
      %v1741 = vadd.f32 %v813, %v1740
      %v1742 = vpop.f32.mrb[0].mxu0
      %1743 = vmatprep.mubr.f32.mxu0 0.0
      %1744 = vmatmul.mubr.f32.gmra.mrb[0].mxu0 %v1622
      %v1745 = vpop.f32.mrb[0].mxu0
      %v1746 = vadd.f32 %v813, %v1745
      %v1747 = vpop.f32.mrb[0].mxu0
      %1748 = vmatprep.mubr.f32.mxu0 0.0
      %1749 = vmatmul.mubr.f32.gmra.mrb[0].mxu0 %v1625
      %v1750 = vpop.f32.mrb[0].mxu0
      %v1751 = vadd.f32 %v813, %v1750
      %v1752 = vpop.f32.mrb[0].mxu0
      %1753 = vmatprep.mubr.f32.mxu0 0.0
      %1754 = vmatmul.mubr.f32.gmra.mrb[0].mxu0 %v1628
      %v1755 = vpop.f32.mrb[0].mxu0
      %v1756 = vadd.f32 %v813, %v1755
      %v1757 = vpop.f32.mrb[0].mxu0
      %1758 = vmatprep.mubr.f32.mxu0 0.0
      %1759 = vmatmul.mubr.f32.gmra.mrb[0].mxu0 %v1631
      %v1760 = vpop.f32.mrb[0].mxu0
      %v1761 = vadd.f32 %v813, %v1760
      %v1762 = vpop.f32.mrb[0].mxu0
      %1763 = vmatprep.mubr.f32.mxu0 0.0
      %1764 = vmatmul.mubr.f32.gmra.mrb[0].mxu0 %v1634
      %v1765 = vpop.f32.mrb[0].mxu0
      %v1766 = vadd.f32 %v813, %v1765
      %v1767 = vpop.f32.mrb[0].mxu0
      %1768 = vmatprep.mubr.f32.mxu0 0.0
      %1769 = vmatmul.mubr.f32.gmra.mrb[0].mxu0 %v1637
      %v1770 = vpop.f32.mrb[0].mxu0
      %v1771 = vadd.f32 %v813, %v1770
      %v1772 = vpop.f32.mrb[0].mxu0
      %1773 = vmatprep.mubr.f32.mxu0 0.0
      %1774 = vmatmul.mubr.f32.gmra.mrb[0].mxu0 %v1640
      %v1775 = vpop.f32.mrb[0].mxu0
      %v1776 = vadd.f32 %v813, %v1775
      %v1777 = vpop.f32.mrb[0].mxu0
      %1778 = vmatprep.mubr.f32.mxu0 0.0
      %1779 = vmatmul.mubr.f32.gmra.mrb[0].mxu0 %v1643
      %v1780 = vpop.f32.mrb[0].mxu0
      %v1781 = vadd.f32 %v813, %v1780
      %v1782 = vpop.f32.mrb[0].mxu0
      %1783 = vmatprep.mubr.f32.mxu0 0.0
      %1784 = vmatmul.mubr.f32.gmra.mrb[0].mxu0 %v1646
      %v1785 = vpop.f32.mrb[0].mxu0
      %v1786 = vadd.f32 %v813, %v1785
      %v1787 = vpop.f32.mrb[0].mxu0
      %1788 = vmatprep.mubr.f32.mxu0 0.0
      %1789 = vmatmul.mubr.f32.gmra.mrb[0].mxu0 %v1649
      %v1790 = vpop.f32.mrb[0].mxu0
      %v1791 = vadd.f32 %v813, %v1790
      %v1792 = vpop.f32.mrb[0].mxu0
      %1793 = vmatprep.mubr.f32.mxu0 0.0
      %1794 = vmatmul.mubr.f32.gmra.mrb[0].mxu0 %v1652
      %v1795 = vpop.f32.mrb[0].mxu0
      %v1796 = vadd.f32 %v813, %v1795
      %v1797 = vpop.f32.mrb[0].mxu0
      %1798 = vdwg.mxu0
      %1807 = vrot.lane.b32.xlu0 %v1761, 64
      %v1808 = vpop.permute.xlu0 %1807
      %1809 = vrot.lane.b32.xlu0 %v1766, 64
      %v1810 = vpop.permute.xlu0 %1809
      %1811 = vrot.lane.b32.xlu0 %v1771, 64
      %v1812 = vpop.permute.xlu0 %1811
      %1813 = vrot.lane.b32.xlu0 %v1776, 64
      %v1814 = vpop.permute.xlu0 %1813
      %1815 = vrot.lane.b32.xlu0 %v1781, 64
      %v1816 = vpop.permute.xlu0 %1815
      %1817 = vrot.lane.b32.xlu0 %v1786, 64
      %v1818 = vpop.permute.xlu0 %1817
      %1819 = vrot.lane.b32.xlu0 %v1791, 64
      %v1820 = vpop.permute.xlu0 %1819
      %1821 = vrot.lane.b32.xlu0 %v1796, 64
      %v1822 = vpop.permute.xlu0 %1821
      %v1831 = vsel %vm346, %v1721, %v1808
      %v1832 = vsel %vm346, %v1726, %v1810
      %v1833 = vsel %vm346, %v1731, %v1812
      %v1834 = vsel %vm346, %v1736, %v1814
      %v1835 = vsel %vm346, %v1741, %v1816
      %v1836 = vsel %vm346, %v1746, %v1818
      %v1837 = vsel %vm346, %v1751, %v1820
      %v1838 = vsel %vm346, %v1756, %v1822
      %s1839 = scalar_lea.vmem %s328, 128
      %1840 = vst [vmem:[%s1839] sm:$0xff] %v1831
      %1841 = vst [vmem:[%s1839 + $0x8] sm:$0xff] %v1832
      %1842 = vst [vmem:[%s1839 + $0x10] sm:$0xff] %v1833
      %1843 = vst [vmem:[%s1839 + $0x18] sm:$0xff] %v1834
      %1844 = vst [vmem:[%s1839 + $0x20] sm:$0xff] %v1835
      %1845 = vst [vmem:[%s1839 + $0x28] sm:$0xff] %v1836
      %1846 = vst [vmem:[%s1839 + $0x30] sm:$0xff] %v1837
      %1847 = vst [vmem:[%s1839 + $0x38] sm:$0xff] %v1838
      %s1848 = smul.u32 8, %s22
      %p1849 = scmp.lt.s32.totalorder %s21, 1
      %s1850 = scalar_select %p1849, %s21, 1
      %p1851 = scmp.lt.s32.totalorder %s1848, 7
      %s1852 = scalar_select %p1851, %s1848, 7
      %s1853 = smul.addr %s1850, 24
      %s1854 = sadd.s32 %s1852, %s1853
      %s1855 = smul.addr %s1854, 8
      %s1856 = scalar_lea.vmem %s6, %s1855
      // Predicated region
      $region45: #{encoder_pos_embedding_forward.1} parent=43 // pred_check
        %p1857 = pneg %p192
      $region46: #{encoder_pos_embedding_forward.1} parent=43 // pred_check_branch
        %1859 = sbr.rel (%p1857) target = $region48
      $region47: #{encoder_pos_embedding_forward.1} parent=43 // pred_region
        %s1860 = smul.u32 8, %s22
      $region48: #{encoder_pos_embedding_forward.1} parent=43 // pred_fallthru
        _
    $region44: #{encoder_pos_embedding_forward.1} parent=5 // pred_fallthru
      _
    %p1861 = scmp.le.s32.totalorder 2, %s12
    // Predicated region
    $region49: #{encoder_pos_embedding_forward.1} parent=5 // pred_check
      %p1862 = pneg %p1861
    $region50: #{encoder_pos_embedding_forward.1} parent=5 // pred_check_branch
      %1864 = sbr.rel (%p1862) target = $region52
    $region51: #{encoder_pos_embedding_forward.1} parent=5 // pred_region
      %s1865 = ssub.s32 %s12, 2
      // Predicated region
      $region53: #{encoder_pos_embedding_forward.1} parent=51 // pred_check
        %p1866 = pneg %p198
      $region54: #{encoder_pos_embedding_forward.1} parent=51 // pred_check_branch
        %1868 = sbr.rel (%p1866) target = $region56
      $region55: #{encoder_pos_embedding_forward.1} parent=51 // pred_region
        %s1869 = smul.u32 8, %s24
        %p1870 = scmp.lt.s32.totalorder %s23, 1
        %s1871 = scalar_select %p1870, %s23, 1
        %p1872 = scmp.lt.s32.totalorder %s1869, 7
        %s1873 = scalar_select %p1872, %s1869, 7
        %s1874 = smul.addr %s1871, 24
        %s1875 = sadd.s32 %s1873, %s1874
        %s1876 = smul.addr %s1875, 8
        %s1877 = scalar_lea.vmem %s6, %s1876
      $region56: #{encoder_pos_embedding_forward.1} parent=51 // pred_fallthru
        _
    $region52: #{encoder_pos_embedding_forward.1} parent=5 // pred_fallthru
      _
  $region6: #{encoder_pos_embedding_forward.1} parent=0 // loop_footer
    %s16 = sadd.s32 1, %s12
  $region7: #{encoder_pos_embedding_forward.1} parent=0 // loop_footer_branch
    %11 = sbr.rel target = $region3
  $region8: #{encoder_pos_embedding_forward.1} parent=0 // loop_exit
    _

</llo_original>
